<compile_context>
chip_gen: v5e
topology: v5e:2x2
jax: 0.10.0
libtpu: 0.0.40
codegen_flags: <defaults>
</compile_context>

<pallas_src>
import math

import jax
import jax.numpy as jnp
from jax.experimental import pallas as pl
from jax.experimental.pallas import tpu as pltpu

LANE = 128  # lane-dense padding width for the mu|logvar kernel output

# ----------------------------------------------------------------------------
# Model configuration (consistent with the module's __init__ arguments)
# ----------------------------------------------------------------------------
CFG = dict(
    image_H=16, image_W=16,
    input_channels=1, output_channels=1,
    num_classes=1, class_sizes=[3],
    latent_dim=32, tr_dim=32,
    temporal_dim=16, cat_dims=[8], cvae_yemb_dims=[8],
    num_heads=2, num_ref_points=8,
    minT=0.0, maxT=1.0,
    enc_hidden=64, dec_hidden=64,
)
KQ_DIM = CFG["temporal_dim"] + sum(CFG["cat_dims"])      # 24
NH = CFG["num_heads"]                                    # 2
HEAD_DIM = KQ_DIM // NH                                  # 12
V_HEAD_DIM = 16                                          # value head dim
VD = NH * V_HEAD_DIM                                     # 32
LD = CFG["latent_dim"]                                   # 32
TRD = CFG["tr_dim"]                                      # 32
HW = CFG["image_H"] * CFG["image_W"]                     # 256
ATT_SCALE = 1.0 / math.sqrt(HEAD_DIM)


# ----------------------------------------------------------------------------
# In-kernel multi-head attention helper (merged-head activations in, per-head
# softmax, concatenated heads out).  bf16 at MXU boundaries, f32 elementwise.
# ----------------------------------------------------------------------------
def _mha_heads(q_all, k_all, v_all, bias):
    """q_all: (Tq, NH*HEAD_DIM), k_all: (Tk, NH*HEAD_DIM), v_all: (Tk, NH*V_HEAD_DIM).
    bias: (1, Tk) additive mask bias or None.  Returns (Tq, NH*V_HEAD_DIM) f32."""
    bf = jnp.bfloat16
    heads = []
    for h in range(NH):  # NH is tiny & static -> unrolled
        qh = q_all[:, h * HEAD_DIM:(h + 1) * HEAD_DIM].astype(bf)
        kh = k_all[:, h * HEAD_DIM:(h + 1) * HEAD_DIM].astype(bf)
        s = jax.lax.dot_general(qh, kh, (((1,), (1,)), ((), ())),
                                preferred_element_type=jnp.float32) * ATT_SCALE
        if bias is not None:
            s = s + bias
        s = s - jnp.max(s, axis=-1, keepdims=True)
        p = jnp.exp(s)
        p = p * pl.reciprocal(jnp.sum(p, axis=-1, keepdims=True), approx=True)
        vh = v_all[:, h * V_HEAD_DIM:(h + 1) * V_HEAD_DIM].astype(bf)
        heads.append(jnp.dot(p.astype(bf), vh, preferred_element_type=jnp.float32))
    return jnp.concatenate(heads, axis=-1)


# ----------------------------------------------------------------------------
# Fully fused forward kernel — one grid step == one batch element (T rows).
# ----------------------------------------------------------------------------
def fused_forward_kernel(
        x_ref, yemb_ref, kq_ref, eps_ref, maskb_ref,            # per-batch (squeezed)
        qenc_ref, kdec_ref,                                      # precomputed refq proj
        ew1x_ref, ew1y_ref, eb1_ref, ew2_ref, eb2_ref,           # CVAE encoder
        tewk_ref, tebk_ref, tewv_ref, tebv_ref, tewo_ref, tebo_ref,  # tr. encoder
        tdwq_ref, tdbq_ref, tdwv_ref, tdbv_ref, tdwo_ref, tdbo_ref,  # tr. decoder
        dw1z_ref, dw1y_ref, db1_ref, dw2_ref, db2_ref,           # CVAE decoder
        mulv_ref, xhat_ref):                                     # outputs
    f32 = jnp.float32
    bf = jnp.bfloat16

    # ---- stage A: CVAE encode (x,y) -> [mu | logvar] -> reparameterized z ----
    h1 = (jnp.dot(x_ref[...], ew1x_ref[...], preferred_element_type=f32)
          + jnp.dot(yemb_ref[...], ew1y_ref[...], preferred_element_type=f32)
          + eb1_ref[...])
    h1 = jnp.maximum(h1, 0.0)
    mulv = (jnp.dot(h1.astype(bf), ew2_ref[...], preferred_element_type=f32)
            + eb2_ref[...])                                      # (T, 128) [mu|lv|0]
    mulv_ref[...] = mulv
    mu = mulv[:, :LD]
    logvar = mulv[:, LD:2 * LD]
    z = mu + jnp.exp(0.5 * logvar) * eps_ref[...]                # (T, LD) f32

    # ---- stage B: transformer encoder (observed points -> reference points) ----
    k_all = (jnp.dot(kq_ref[...], tewk_ref[...], preferred_element_type=f32)
             + tebk_ref[...])                                    # (T, NH*dh)
    v_all = (jnp.dot(z.astype(bf), tewv_ref[...], preferred_element_type=f32)
             + tebv_ref[...])                                    # (T, NH*dv)
    att_e = _mha_heads(qenc_ref[...], k_all, v_all, maskb_ref[...])
    tr = (jnp.dot(att_e.astype(bf), tewo_ref[...], preferred_element_type=f32)
          + tebo_ref[...])                                       # (R, TRD) f32

    # ---- stage C: transformer decoder (reference points -> observed) + residual ----
    q_all = (jnp.dot(kq_ref[...], tdwq_ref[...], preferred_element_type=f32)
             + tdbq_ref[...])                                    # (T, NH*dh)
    vd_all = (jnp.dot(tr.astype(bf), tdwv_ref[...], preferred_element_type=f32)
              + tdbv_ref[...])                                   # (R, NH*dv)
    att_d = _mha_heads(q_all, kdec_ref[...], vd_all, None)
    z_dec = (jnp.dot(att_d.astype(bf), tdwo_ref[...], preferred_element_type=f32)
             + tdbo_ref[...]) + z                                # (T, LD)  residual

    # ---- stage D: CVAE decode ----
    hd = (jnp.dot(z_dec.astype(bf), dw1z_ref[...], preferred_element_type=f32)
          + jnp.dot(yemb_ref[...], dw1y_ref[...], preferred_element_type=f32)
          + db1_ref[...])
    hd = jnp.maximum(hd, 0.0)
    xo = (jnp.dot(hd.astype(bf), dw2_ref[...], preferred_element_type=f32)
          + db2_ref[...])
    xhat_ref[...] = jax.nn.sigmoid(xo)


def fused_forward(pp, x_bf, yemb_bf, kq_bf, eps, maskb):
    """Single pallas_call for the whole forward pass; grid over batch (parallel)."""
    N, T, _ = x_bf.shape

    def per_batch(arr):
        r, c = arr.shape[1], arr.shape[2]
        return pl.BlockSpec((None, r, c), lambda b: (b, 0, 0))

    def shared(arr):
        return pl.BlockSpec(arr.shape, lambda b: (0, 0))

    batch_args = [x_bf, yemb_bf, kq_bf, eps, maskb]
    weight_names = [
        "qenc", "kdec",
        "enc_w1x", "enc_w1y", "enc_b1", "enc_w2", "enc_b2",
        "tre_wk", "tre_bk", "tre_wv", "tre_bv", "tre_wo", "tre_bo",
        "trd_wq", "trd_bq", "trd_wv", "trd_bv", "trd_wo", "trd_bo",
        "dec_w1z", "dec_w1y", "dec_b1", "dec_w2", "dec_b2",
    ]
    weights = [pp[n] for n in weight_names]

    in_specs = [per_batch(a) for a in batch_args] + [shared(w) for w in weights]

    mulv, xhat = pl.pallas_call(
        fused_forward_kernel,
        out_shape=(jax.ShapeDtypeStruct((N, T, LANE), jnp.float32),
                   jax.ShapeDtypeStruct((N, T, HW), jnp.float32)),
        grid=(N,),
        in_specs=in_specs,
        out_specs=(pl.BlockSpec((None, T, LANE), lambda b: (b, 0, 0)),
                   pl.BlockSpec((None, T, HW), lambda b: (b, 0, 0))),
        compiler_params=pltpu.CompilerParams(
            dimension_semantics=("parallel",)),
    )(*batch_args, *weights)
    return mulv, xhat


# ----------------------------------------------------------------------------
# Parameters: deterministic synthetic weights (no checkpoint load)
# ----------------------------------------------------------------------------
def init_params(key):
    c = CFG
    shapes = {
        # CVAE encoder
        "cvae_yemb": (c["class_sizes"][0], c["cvae_yemb_dims"][0]),
        "enc_w1": (HW + c["cvae_yemb_dims"][0], c["enc_hidden"]),
        "enc_wmu": (c["enc_hidden"], LD),
        "enc_wlv": (c["enc_hidden"], LD),
        # categorical + reference-point embeddings for the transformer
        "cat_emb": (c["class_sizes"][0], c["cat_dims"][0]),
        "ref_query": (c["num_ref_points"], KQ_DIM),
        # transformer encoder projections (merged heads)
        "tre_wq": (KQ_DIM, NH * HEAD_DIM), "tre_wk": (KQ_DIM, NH * HEAD_DIM),
        "tre_wv": (LD, VD), "tre_wo": (VD, TRD),
        # transformer decoder projections
        "trd_wq": (KQ_DIM, NH * HEAD_DIM), "trd_wk": (KQ_DIM, NH * HEAD_DIM),
        "trd_wv": (TRD, VD), "trd_wo": (VD, LD),
        # CVAE decoder
        "dec_w1": (LD + c["cvae_yemb_dims"][0], c["dec_hidden"]),
        "dec_wout": (c["dec_hidden"], HW),
    }
    params = {}
    keys = jax.random.split(key, len(shapes))
    for (name, shp), k in zip(shapes.items(), keys):
        params[name] = (0.02 * jax.random.normal(k, shp)).astype(jnp.float32)
    bias_for = ["enc_w1", "enc_wmu", "enc_wlv",
                "tre_wq", "tre_wk", "tre_wv", "tre_wo",
                "trd_wq", "trd_wk", "trd_wv", "trd_wo",
                "dec_w1", "dec_wout"]
    for name in bias_for:
        params["b_" + name] = jnp.zeros((shapes[name][1],), jnp.float32)
    return params


def _pad_cols(w, width):
    out = jnp.zeros((w.shape[0], width), w.dtype)
    return out.at[:, : w.shape[1]].set(w)


def pack_params(p):
    """Fuse / pad / split / bf16-cast weights once (outside jit)."""
    bf = jnp.bfloat16
    pp = {}
    # embedding tables used by plain-JAX gathers in the wrapper
    pp["cvae_yemb"] = p["cvae_yemb"]
    pp["cat_emb"] = p["cat_emb"]

    # batch-invariant reference-point projections hoisted out of the kernel
    refq = p["ref_query"]
    pp["qenc"] = (refq @ p["tre_wq"] + p["b_tre_wq"][None, :]).astype(bf)  # (R, NH*dh)
    pp["kdec"] = (refq @ p["trd_wk"] + p["b_trd_wk"][None, :]).astype(bf)  # (R, NH*dh)

    # CVAE encoder: split w1 rows (image | y-emb); fuse mu/logvar, pad to 128 lanes
    pp["enc_w1x"] = p["enc_w1"][:HW].astype(bf)
    pp["enc_w1y"] = p["enc_w1"][HW:].astype(bf)
    pp["enc_b1"] = p["b_enc_w1"].reshape(1, -1)
    w_mulv = jnp.concatenate([p["enc_wmu"], p["enc_wlv"]], axis=1)
    b_mulv = jnp.concatenate([p["b_enc_wmu"], p["b_enc_wlv"]]).reshape(1, -1)
    pp["enc_w2"] = _pad_cols(w_mulv, LANE).astype(bf)
    pp["enc_b2"] = _pad_cols(b_mulv, LANE)

    # transformer encoder (merged-head projections, f32 biases)
    pp["tre_wk"] = p["tre_wk"].astype(bf)
    pp["tre_bk"] = p["b_tre_wk"].reshape(1, -1)
    pp["tre_wv"] = p["tre_wv"].astype(bf)
    pp["tre_bv"] = p["b_tre_wv"].reshape(1, -1)
    pp["tre_wo"] = p["tre_wo"].astype(bf)
    pp["tre_bo"] = p["b_tre_wo"].reshape(1, -1)

    # transformer decoder
    pp["trd_wq"] = p["trd_wq"].astype(bf)
    pp["trd_bq"] = p["b_trd_wq"].reshape(1, -1)
    pp["trd_wv"] = p["trd_wv"].astype(bf)
    pp["trd_bv"] = p["b_trd_wv"].reshape(1, -1)
    pp["trd_wo"] = p["trd_wo"].astype(bf)
    pp["trd_bo"] = p["b_trd_wo"].reshape(1, -1)

    # CVAE decoder: split w1 rows (z | y-emb)
    pp["dec_w1z"] = p["dec_w1"][:LD].astype(bf)
    pp["dec_w1y"] = p["dec_w1"][LD:].astype(bf)
    pp["dec_b1"] = p["b_dec_w1"].reshape(1, -1)
    pp["dec_w2"] = p["dec_wout"].astype(bf)
    pp["dec_b2"] = p["b_dec_wout"].reshape(1, -1)
    return pp


def time_embed(t, dim):
    """Fixed sinusoidal temporal embedding (learn_temporal_emb=False)."""
    half = dim // 2
    freqs = jnp.exp(-jnp.log(10000.0) * jnp.arange(half, dtype=jnp.float32) / half)
    ang = t[..., None] * freqs
    return jnp.concatenate([jnp.sin(ang), jnp.cos(ang)], axis=-1)


# ----------------------------------------------------------------------------
# Forward pass of CatConTransformer (is_label=False path: adversaries are None)
# ----------------------------------------------------------------------------
@jax.jit
def catcon_forward(pp, xs, ts, ys, mask, rng):
    N, T = xs.shape[0], xs.shape[1]
    bf = jnp.bfloat16
    NT = N * T

    # feature construction (tiny XLA ops): pixel flatten, embedding gathers,
    # temporal embedding, reparameterization noise, additive mask bias
    x_bf = xs.reshape(N, T, HW).astype(bf)
    yemb = pp["cvae_yemb"][ys].astype(bf)                              # (N,T,8)
    te = time_embed(ts, CFG["temporal_dim"])                           # (N,T,16)
    ce = pp["cat_emb"][ys]                                             # (N,T,8)
    kq = jnp.concatenate([te, ce], axis=-1).astype(bf)                 # (N,T,24)
    eps = jax.random.normal(rng, (N, T, LD), dtype=jnp.float32)
    maskb = ((1.0 - mask) * (-1e9)).reshape(N, 1, T).astype(jnp.float32)

    # single fused kernel: CVAE encode + reparam -> enc attention -> dec attention
    # + residual -> CVAE decode
    mulv, xhat = fused_forward(pp, x_bf, yemb, kq, eps, maskb)

    mu = mulv[..., :LD].reshape(NT, LD)
    logvar = mulv[..., LD:2 * LD].reshape(NT, LD)
    xhat = xhat.reshape(N, T, 1, CFG["image_H"], CFG["image_W"])

    # TODO(synk): adversary branch (is_label=True / CatConAdversary) not exercised;
    # returns None exactly like the reference is_label=False path.
    adv_cvae, adv_tr = None, None
    return xhat, mu, logvar, adv_cvae, adv_tr


# ----------------------------------------------------------------------------
if __name__ == "__main__":
    key = jax.random.PRNGKey(0)
    k_par, k_x, k_y, k_eps = jax.random.split(key, 4)

    N, T = 2, 8
    H, W = CFG["image_H"], CFG["image_W"]

    params = init_params(k_par)
    pp = pack_params(params)   # fuse / pad / split / bf16-cast weights once

    xs = jax.random.uniform(k_x, (N, T, 1, H, W), dtype=jnp.float32)
    ts = jnp.broadcast_to(jnp.linspace(CFG["minT"], CFG["maxT"], T,
                                       dtype=jnp.float32), (N, T))
    ys = jax.random.randint(k_y, (N, T), 0, CFG["class_sizes"][0], dtype=jnp.int32)
    mask = jnp.ones((N, T), jnp.float32).at[1, T - 1].set(0.0)

    xhat, mu, logvar, adv_cvae, adv_tr = catcon_forward(pp, xs, ts, ys, mask, k_eps)
    jax.block_until_ready(xhat)
    jax.block_until_ready(mu)
    jax.block_until_ready(logvar)

    assert xhat.shape == (N, T, 1, H, W)
    assert mu.shape == (N * T, LD)
    assert logvar.shape == (N * T, LD)
    assert bool(jnp.all(jnp.isfinite(xhat)))
    assert bool(jnp.all(jnp.isfinite(mu))) and bool(jnp.all(jnp.isfinite(logvar)))
    print("KERNEL_OK")
</pallas_src>

<mosaic_0001>
module attributes {stable_mosaic.version = 11 : i64} {
  func.func @fused_forward_kernel(%arg0: i32, %arg1: memref<1x8x256xbf16, #tpu.memory_space<vmem>>, %arg2: memref<1x8x8xbf16, #tpu.memory_space<vmem>>, %arg3: memref<1x8x24xbf16, #tpu.memory_space<vmem>>, %arg4: memref<1x8x32xf32, #tpu.memory_space<vmem>>, %arg5: memref<1x1x8xf32, #tpu.memory_space<vmem>>, %arg6: memref<8x24xbf16, #tpu.memory_space<vmem>>, %arg7: memref<8x24xbf16, #tpu.memory_space<vmem>>, %arg8: memref<256x64xbf16, #tpu.memory_space<vmem>>, %arg9: memref<8x64xbf16, #tpu.memory_space<vmem>>, %arg10: memref<1x64xf32, #tpu.memory_space<vmem>>, %arg11: memref<64x128xbf16, #tpu.memory_space<vmem>>, %arg12: memref<1x128xf32, #tpu.memory_space<vmem>>, %arg13: memref<24x24xbf16, #tpu.memory_space<vmem>>, %arg14: memref<1x24xf32, #tpu.memory_space<vmem>>, %arg15: memref<32x32xbf16, #tpu.memory_space<vmem>>, %arg16: memref<1x32xf32, #tpu.memory_space<vmem>>, %arg17: memref<32x32xbf16, #tpu.memory_space<vmem>>, %arg18: memref<1x32xf32, #tpu.memory_space<vmem>>, %arg19: memref<24x24xbf16, #tpu.memory_space<vmem>>, %arg20: memref<1x24xf32, #tpu.memory_space<vmem>>, %arg21: memref<32x32xbf16, #tpu.memory_space<vmem>>, %arg22: memref<1x32xf32, #tpu.memory_space<vmem>>, %arg23: memref<32x32xbf16, #tpu.memory_space<vmem>>, %arg24: memref<1x32xf32, #tpu.memory_space<vmem>>, %arg25: memref<32x64xbf16, #tpu.memory_space<vmem>>, %arg26: memref<8x64xbf16, #tpu.memory_space<vmem>>, %arg27: memref<1x64xf32, #tpu.memory_space<vmem>>, %arg28: memref<64x256xbf16, #tpu.memory_space<vmem>>, %arg29: memref<1x256xf32, #tpu.memory_space<vmem>>, %arg30: memref<1x8x128xf32, #tpu.memory_space<vmem>>, %arg31: memref<1x8x256xf32, #tpu.memory_space<vmem>>) attributes {dimension_semantics = [#tpu.dimension_semantics<parallel>], iteration_bounds = array<i64: 2>, scalar_prefetch = 0 : i64, scratch_operands = 0 : i64, tpu.core_type = #tpu.core_type<tc>, window_params = [{transform_indices = @transform_0, window_bounds = array<i64: 1, 8, 256>}, {transform_indices = @transform_1, window_bounds = array<i64: 1, 8, 8>}, {transform_indices = @transform_2, window_bounds = array<i64: 1, 8, 24>}, {transform_indices = @transform_3, window_bounds = array<i64: 1, 8, 32>}, {transform_indices = @transform_4, window_bounds = array<i64: 1, 1, 8>}, {pipeline_mode = #tpu.pipeline_mode<synchronous>, transform_indices = @transform_5, window_bounds = array<i64: 8, 24>}, {pipeline_mode = #tpu.pipeline_mode<synchronous>, transform_indices = @transform_6, window_bounds = array<i64: 8, 24>}, {pipeline_mode = #tpu.pipeline_mode<synchronous>, transform_indices = @transform_7, window_bounds = array<i64: 256, 64>}, {pipeline_mode = #tpu.pipeline_mode<synchronous>, transform_indices = @transform_8, window_bounds = array<i64: 8, 64>}, {pipeline_mode = #tpu.pipeline_mode<synchronous>, transform_indices = @transform_9, window_bounds = array<i64: 1, 64>}, {pipeline_mode = #tpu.pipeline_mode<synchronous>, transform_indices = @transform_10, window_bounds = array<i64: 64, 128>}, {pipeline_mode = #tpu.pipeline_mode<synchronous>, transform_indices = @transform_11, window_bounds = array<i64: 1, 128>}, {pipeline_mode = #tpu.pipeline_mode<synchronous>, transform_indices = @transform_12, window_bounds = array<i64: 24, 24>}, {pipeline_mode = #tpu.pipeline_mode<synchronous>, transform_indices = @transform_13, window_bounds = array<i64: 1, 24>}, {pipeline_mode = #tpu.pipeline_mode<synchronous>, transform_indices = @transform_14, window_bounds = array<i64: 32, 32>}, {pipeline_mode = #tpu.pipeline_mode<synchronous>, transform_indices = @transform_15, window_bounds = array<i64: 1, 32>}, {pipeline_mode = #tpu.pipeline_mode<synchronous>, transform_indices = @transform_16, window_bounds = array<i64: 32, 32>}, {pipeline_mode = #tpu.pipeline_mode<synchronous>, transform_indices = @transform_17, window_bounds = array<i64: 1, 32>}, {pipeline_mode = #tpu.pipeline_mode<synchronous>, transform_indices = @transform_18, window_bounds = array<i64: 24, 24>}, {pipeline_mode = #tpu.pipeline_mode<synchronous>, transform_indices = @transform_19, window_bounds = array<i64: 1, 24>}, {pipeline_mode = #tpu.pipeline_mode<synchronous>, transform_indices = @transform_20, window_bounds = array<i64: 32, 32>}, {pipeline_mode = #tpu.pipeline_mode<synchronous>, transform_indices = @transform_21, window_bounds = array<i64: 1, 32>}, {pipeline_mode = #tpu.pipeline_mode<synchronous>, transform_indices = @transform_22, window_bounds = array<i64: 32, 32>}, {pipeline_mode = #tpu.pipeline_mode<synchronous>, transform_indices = @transform_23, window_bounds = array<i64: 1, 32>}, {pipeline_mode = #tpu.pipeline_mode<synchronous>, transform_indices = @transform_24, window_bounds = array<i64: 32, 64>}, {pipeline_mode = #tpu.pipeline_mode<synchronous>, transform_indices = @transform_25, window_bounds = array<i64: 8, 64>}, {pipeline_mode = #tpu.pipeline_mode<synchronous>, transform_indices = @transform_26, window_bounds = array<i64: 1, 64>}, {pipeline_mode = #tpu.pipeline_mode<synchronous>, transform_indices = @transform_27, window_bounds = array<i64: 64, 256>}, {pipeline_mode = #tpu.pipeline_mode<synchronous>, transform_indices = @transform_28, window_bounds = array<i64: 1, 256>}, {transform_indices = @transform_29, window_bounds = array<i64: 1, 8, 128>}, {transform_indices = @transform_30, window_bounds = array<i64: 1, 8, 256>}]} {
    %c0 = arith.constant 0 : index
    %c0_0 = arith.constant 0 : index
    %c0_1 = arith.constant 0 : index
    %0 = vector.load %arg1[%c0, %c0_0, %c0_1] : memref<1x8x256xbf16, #tpu.memory_space<vmem>>, vector<1x8x256xbf16>
    %1 = vector.shape_cast %0 : vector<1x8x256xbf16> to vector<8x256xbf16>
    %c0_2 = arith.constant 0 : index
    %c0_3 = arith.constant 0 : index
    %2 = vector.load %arg8[%c0_2, %c0_3] : memref<256x64xbf16, #tpu.memory_space<vmem>>, vector<256x64xbf16>
    %cst = arith.constant dense<0.000000e+00> : vector<8x64xf32>
    %3 = tpu.matmul %1, %2, %cst {dimension_numbers = #tpu.dot_dimension_numbers<[1], [0], [0], [1], [0, 0, 1, 1], [], []>} : vector<8x256xbf16>, vector<256x64xbf16>, vector<8x64xf32> -> vector<8x64xf32>
    %c0_4 = arith.constant 0 : index
    %c0_5 = arith.constant 0 : index
    %c0_6 = arith.constant 0 : index
    %4 = vector.load %arg2[%c0_4, %c0_5, %c0_6] : memref<1x8x8xbf16, #tpu.memory_space<vmem>>, vector<1x8x8xbf16>
    %5 = vector.shape_cast %4 : vector<1x8x8xbf16> to vector<8x8xbf16>
    %c0_7 = arith.constant 0 : index
    %c0_8 = arith.constant 0 : index
    %6 = vector.load %arg9[%c0_7, %c0_8] : memref<8x64xbf16, #tpu.memory_space<vmem>>, vector<8x64xbf16>
    %cst_9 = arith.constant dense<0.000000e+00> : vector<8x64xf32>
    %7 = tpu.matmul %5, %6, %cst_9 {dimension_numbers = #tpu.dot_dimension_numbers<[1], [0], [0], [1], [0, 0, 1, 1], [], []>} : vector<8x8xbf16>, vector<8x64xbf16>, vector<8x64xf32> -> vector<8x64xf32>
    %8 = arith.addf %3, %7 : vector<8x64xf32>
    %c0_10 = arith.constant 0 : index
    %c0_11 = arith.constant 0 : index
    %9 = vector.load %arg10[%c0_10, %c0_11] : memref<1x64xf32, #tpu.memory_space<vmem>>, vector<1x64xf32>
    %10 = vector.broadcast %9 : vector<1x64xf32> to vector<8x64xf32>
    %11 = arith.addf %8, %10 : vector<8x64xf32>
    %cst_12 = arith.constant 0.000000e+00 : f32
    %12 = vector.broadcast %cst_12 : f32 to vector<8x64xf32>
    %13 = arith.maximumf %11, %12 : vector<8x64xf32>
    %14 = arith.truncf %13 : vector<8x64xf32> to vector<8x64xbf16>
    %c0_13 = arith.constant 0 : index
    %c0_14 = arith.constant 0 : index
    %15 = vector.load %arg11[%c0_13, %c0_14] : memref<64x128xbf16, #tpu.memory_space<vmem>>, vector<64x128xbf16>
    %cst_15 = arith.constant dense<0.000000e+00> : vector<8x128xf32>
    %16 = tpu.matmul %14, %15, %cst_15 {dimension_numbers = #tpu.dot_dimension_numbers<[1], [0], [0], [1], [0, 0, 1, 1], [], []>} : vector<8x64xbf16>, vector<64x128xbf16>, vector<8x128xf32> -> vector<8x128xf32>
    %c0_16 = arith.constant 0 : index
    %c0_17 = arith.constant 0 : index
    %17 = vector.load %arg12[%c0_16, %c0_17] : memref<1x128xf32, #tpu.memory_space<vmem>>, vector<1x128xf32>
    %18 = vector.broadcast %17 : vector<1x128xf32> to vector<8x128xf32>
    %19 = arith.addf %16, %18 : vector<8x128xf32>
    %c0_18 = arith.constant 0 : index
    %c0_19 = arith.constant 0 : index
    %c0_20 = arith.constant 0 : index
    %20 = vector.load %arg30[%c0_18, %c0_19, %c0_20] : memref<1x8x128xf32, #tpu.memory_space<vmem>>, vector<1x8x128xf32>
    %21 = vector.shape_cast %20 : vector<1x8x128xf32> to vector<8x128xf32>
    %22 = vector.shape_cast %19 : vector<8x128xf32> to vector<1x8x128xf32>
    tpu.vector_store %arg30[%c0_18, %c0_19, %c0_20], %22 {strides = array<i32>} : memref<1x8x128xf32, #tpu.memory_space<vmem>>, vector<1x8x128xf32>,
    %23 = vector.extract_strided_slice %19 {offsets = [0, 0], sizes = [8, 32], strides = [1, 1]} : vector<8x128xf32> to vector<8x32xf32>
    %24 = vector.extract_strided_slice %19 {offsets = [0, 32], sizes = [8, 32], strides = [1, 1]} : vector<8x128xf32> to vector<8x32xf32>
    %cst_21 = arith.constant 5.000000e-01 : f32
    %25 = vector.broadcast %cst_21 : f32 to vector<8x32xf32>
    %26 = arith.mulf %25, %24 : vector<8x32xf32>
    %27 = math.exp %26 : vector<8x32xf32>
    %c0_22 = arith.constant 0 : index
    %c0_23 = arith.constant 0 : index
    %c0_24 = arith.constant 0 : index
    %28 = vector.load %arg4[%c0_22, %c0_23, %c0_24] : memref<1x8x32xf32, #tpu.memory_space<vmem>>, vector<1x8x32xf32>
    %29 = vector.shape_cast %28 : vector<1x8x32xf32> to vector<8x32xf32>
    %30 = arith.mulf %27, %29 : vector<8x32xf32>
    %31 = arith.addf %23, %30 : vector<8x32xf32>
    %c0_25 = arith.constant 0 : index
    %c0_26 = arith.constant 0 : index
    %c0_27 = arith.constant 0 : index
    %32 = vector.load %arg3[%c0_25, %c0_26, %c0_27] : memref<1x8x24xbf16, #tpu.memory_space<vmem>>, vector<1x8x24xbf16>
    %33 = vector.shape_cast %32 : vector<1x8x24xbf16> to vector<8x24xbf16>
    %c0_28 = arith.constant 0 : index
    %c0_29 = arith.constant 0 : index
    %34 = vector.load %arg13[%c0_28, %c0_29] : memref<24x24xbf16, #tpu.memory_space<vmem>>, vector<24x24xbf16>
    %cst_30 = arith.constant dense<0.000000e+00> : vector<8x24xf32>
    %35 = tpu.matmul %33, %34, %cst_30 {dimension_numbers = #tpu.dot_dimension_numbers<[1], [0], [0], [1], [0, 0, 1, 1], [], []>} : vector<8x24xbf16>, vector<24x24xbf16>, vector<8x24xf32> -> vector<8x24xf32>
    %c0_31 = arith.constant 0 : index
    %c0_32 = arith.constant 0 : index
    %36 = vector.load %arg14[%c0_31, %c0_32] : memref<1x24xf32, #tpu.memory_space<vmem>>, vector<1x24xf32>
    %37 = vector.broadcast %36 : vector<1x24xf32> to vector<8x24xf32>
    %38 = arith.addf %35, %37 : vector<8x24xf32>
    %39 = arith.truncf %31 : vector<8x32xf32> to vector<8x32xbf16>
    %c0_33 = arith.constant 0 : index
    %c0_34 = arith.constant 0 : index
    %40 = vector.load %arg15[%c0_33, %c0_34] : memref<32x32xbf16, #tpu.memory_space<vmem>>, vector<32x32xbf16>
    %cst_35 = arith.constant dense<0.000000e+00> : vector<8x32xf32>
    %41 = tpu.matmul %39, %40, %cst_35 {dimension_numbers = #tpu.dot_dimension_numbers<[1], [0], [0], [1], [0, 0, 1, 1], [], []>} : vector<8x32xbf16>, vector<32x32xbf16>, vector<8x32xf32> -> vector<8x32xf32>
    %c0_36 = arith.constant 0 : index
    %c0_37 = arith.constant 0 : index
    %42 = vector.load %arg16[%c0_36, %c0_37] : memref<1x32xf32, #tpu.memory_space<vmem>>, vector<1x32xf32>
    %43 = vector.broadcast %42 : vector<1x32xf32> to vector<8x32xf32>
    %44 = arith.addf %41, %43 : vector<8x32xf32>
    %c0_38 = arith.constant 0 : index
    %c0_39 = arith.constant 0 : index
    %45 = vector.load %arg6[%c0_38, %c0_39] : memref<8x24xbf16, #tpu.memory_space<vmem>>, vector<8x24xbf16>
    %c0_40 = arith.constant 0 : index
    %c0_41 = arith.constant 0 : index
    %c0_42 = arith.constant 0 : index
    %46 = vector.load %arg5[%c0_40, %c0_41, %c0_42] : memref<1x1x8xf32, #tpu.memory_space<vmem>>, vector<1x1x8xf32>
    %47 = vector.shape_cast %46 : vector<1x1x8xf32> to vector<1x8xf32>
    %48 = vector.extract_strided_slice %45 {offsets = [0, 0], sizes = [8, 12], strides = [1, 1]} : vector<8x24xbf16> to vector<8x12xbf16>
    %49 = vector.extract_strided_slice %38 {offsets = [0, 0], sizes = [8, 12], strides = [1, 1]} : vector<8x24xf32> to vector<8x12xf32>
    %50 = arith.truncf %49 : vector<8x12xf32> to vector<8x12xbf16>
    %cst_43 = arith.constant dense<0.000000e+00> : vector<8x8xf32>
    %51 = tpu.matmul %48, %50, %cst_43 {dimension_numbers = #tpu.dot_dimension_numbers<[1], [1], [0], [0], [0, 0, 1, 0], [], []>} : vector<8x12xbf16>, vector<8x12xbf16>, vector<8x8xf32> -> vector<8x8xf32>
    %cst_44 = arith.constant 0.288675129 : f32
    %52 = vector.broadcast %cst_44 : f32 to vector<8x8xf32>
    %53 = arith.mulf %51, %52 : vector<8x8xf32>
    %54 = vector.broadcast %47 : vector<1x8xf32> to vector<8x8xf32>
    %55 = arith.addf %53, %54 : vector<8x8xf32>
    %cst_45 = arith.constant dense<0xFF800000> : vector<8xf32>
    %56 = vector.multi_reduction <maximumf>, %55, %cst_45 [1] : vector<8x8xf32> to vector<8xf32>
    %57 = vector.shape_cast %56 : vector<8xf32> to vector<8x1xf32>
    %58 = vector.broadcast %57 : vector<8x1xf32> to vector<8x8xf32>
    %59 = arith.subf %55, %58 : vector<8x8xf32>
    %60 = math.exp %59 : vector<8x8xf32>
    %cst_46 = arith.constant dense<0.000000e+00> : vector<8xf32>
    %61 = vector.multi_reduction <add>, %60, %cst_46 [1] : vector<8x8xf32> to vector<8xf32>
    %62 = vector.shape_cast %61 : vector<8xf32> to vector<8x1xf32>
    %63 = tpu.reciprocal %62 {approx = true} : vector<8x1xf32> -> vector<8x1xf32>
    %64 = vector.broadcast %63 : vector<8x1xf32> to vector<8x8xf32>
    %65 = arith.mulf %60, %64 : vector<8x8xf32>
    %66 = vector.extract_strided_slice %44 {offsets = [0, 0], sizes = [8, 16], strides = [1, 1]} : vector<8x32xf32> to vector<8x16xf32>
    %67 = arith.truncf %66 : vector<8x16xf32> to vector<8x16xbf16>
    %68 = arith.truncf %65 : vector<8x8xf32> to vector<8x8xbf16>
    %cst_47 = arith.constant dense<0.000000e+00> : vector<8x16xf32>
    %69 = tpu.matmul %68, %67, %cst_47 {dimension_numbers = #tpu.dot_dimension_numbers<[1], [0], [0], [1], [0, 0, 1, 1], [], []>} : vector<8x8xbf16>, vector<8x16xbf16>, vector<8x16xf32> -> vector<8x16xf32>
    %70 = vector.extract_strided_slice %45 {offsets = [0, 12], sizes = [8, 12], strides = [1, 1]} : vector<8x24xbf16> to vector<8x12xbf16>
    %71 = vector.extract_strided_slice %38 {offsets = [0, 12], sizes = [8, 12], strides = [1, 1]} : vector<8x24xf32> to vector<8x12xf32>
    %72 = arith.truncf %71 : vector<8x12xf32> to vector<8x12xbf16>
    %cst_48 = arith.constant dense<0.000000e+00> : vector<8x8xf32>
    %73 = tpu.matmul %70, %72, %cst_48 {dimension_numbers = #tpu.dot_dimension_numbers<[1], [1], [0], [0], [0, 0, 1, 0], [], []>} : vector<8x12xbf16>, vector<8x12xbf16>, vector<8x8xf32> -> vector<8x8xf32>
    %cst_49 = arith.constant 0.288675129 : f32
    %74 = vector.broadcast %cst_49 : f32 to vector<8x8xf32>
    %75 = arith.mulf %73, %74 : vector<8x8xf32>
    %76 = vector.broadcast %47 : vector<1x8xf32> to vector<8x8xf32>
    %77 = arith.addf %75, %76 : vector<8x8xf32>
    %cst_50 = arith.constant dense<0xFF800000> : vector<8xf32>
    %78 = vector.multi_reduction <maximumf>, %77, %cst_50 [1] : vector<8x8xf32> to vector<8xf32>
    %79 = vector.shape_cast %78 : vector<8xf32> to vector<8x1xf32>
    %80 = vector.broadcast %79 : vector<8x1xf32> to vector<8x8xf32>
    %81 = arith.subf %77, %80 : vector<8x8xf32>
    %82 = math.exp %81 : vector<8x8xf32>
    %cst_51 = arith.constant dense<0.000000e+00> : vector<8xf32>
    %83 = vector.multi_reduction <add>, %82, %cst_51 [1] : vector<8x8xf32> to vector<8xf32>
    %84 = vector.shape_cast %83 : vector<8xf32> to vector<8x1xf32>
    %85 = tpu.reciprocal %84 {approx = true} : vector<8x1xf32> -> vector<8x1xf32>
    %86 = vector.broadcast %85 : vector<8x1xf32> to vector<8x8xf32>
    %87 = arith.mulf %82, %86 : vector<8x8xf32>
    %88 = vector.extract_strided_slice %44 {offsets = [0, 16], sizes = [8, 16], strides = [1, 1]} : vector<8x32xf32> to vector<8x16xf32>
    %89 = arith.truncf %88 : vector<8x16xf32> to vector<8x16xbf16>
    %90 = arith.truncf %87 : vector<8x8xf32> to vector<8x8xbf16>
    %cst_52 = arith.constant dense<0.000000e+00> : vector<8x16xf32>
    %91 = tpu.matmul %90, %89, %cst_52 {dimension_numbers = #tpu.dot_dimension_numbers<[1], [0], [0], [1], [0, 0, 1, 1], [], []>} : vector<8x8xbf16>, vector<8x16xbf16>, vector<8x16xf32> -> vector<8x16xf32>
    %92 = tpu.concatenate %69, %91 in 1 : vector<8x16xf32>, vector<8x16xf32> -> vector<8x32xf32>
    %93 = arith.truncf %92 : vector<8x32xf32> to vector<8x32xbf16>
    %c0_53 = arith.constant 0 : index
    %c0_54 = arith.constant 0 : index
    %94 = vector.load %arg17[%c0_53, %c0_54] : memref<32x32xbf16, #tpu.memory_space<vmem>>, vector<32x32xbf16>
    %cst_55 = arith.constant dense<0.000000e+00> : vector<8x32xf32>
    %95 = tpu.matmul %93, %94, %cst_55 {dimension_numbers = #tpu.dot_dimension_numbers<[1], [0], [0], [1], [0, 0, 1, 1], [], []>} : vector<8x32xbf16>, vector<32x32xbf16>, vector<8x32xf32> -> vector<8x32xf32>
    %c0_56 = arith.constant 0 : index
    %c0_57 = arith.constant 0 : index
    %96 = vector.load %arg18[%c0_56, %c0_57] : memref<1x32xf32, #tpu.memory_space<vmem>>, vector<1x32xf32>
    %97 = vector.broadcast %96 : vector<1x32xf32> to vector<8x32xf32>
    %98 = arith.addf %95, %97 : vector<8x32xf32>
    %c0_58 = arith.constant 0 : index
    %c0_59 = arith.constant 0 : index
    %c0_60 = arith.constant 0 : index
    %99 = vector.load %arg3[%c0_58, %c0_59, %c0_60] : memref<1x8x24xbf16, #tpu.memory_space<vmem>>, vector<1x8x24xbf16>
    %100 = vector.shape_cast %99 : vector<1x8x24xbf16> to vector<8x24xbf16>
    %c0_61 = arith.constant 0 : index
    %c0_62 = arith.constant 0 : index
    %101 = vector.load %arg19[%c0_61, %c0_62] : memref<24x24xbf16, #tpu.memory_space<vmem>>, vector<24x24xbf16>
    %cst_63 = arith.constant dense<0.000000e+00> : vector<8x24xf32>
    %102 = tpu.matmul %100, %101, %cst_63 {dimension_numbers = #tpu.dot_dimension_numbers<[1], [0], [0], [1], [0, 0, 1, 1], [], []>} : vector<8x24xbf16>, vector<24x24xbf16>, vector<8x24xf32> -> vector<8x24xf32>
    %c0_64 = arith.constant 0 : index
    %c0_65 = arith.constant 0 : index
    %103 = vector.load %arg20[%c0_64, %c0_65] : memref<1x24xf32, #tpu.memory_space<vmem>>, vector<1x24xf32>
    %104 = vector.broadcast %103 : vector<1x24xf32> to vector<8x24xf32>
    %105 = arith.addf %102, %104 : vector<8x24xf32>
    %106 = arith.truncf %98 : vector<8x32xf32> to vector<8x32xbf16>
    %c0_66 = arith.constant 0 : index
    %c0_67 = arith.constant 0 : index
    %107 = vector.load %arg21[%c0_66, %c0_67] : memref<32x32xbf16, #tpu.memory_space<vmem>>, vector<32x32xbf16>
    %cst_68 = arith.constant dense<0.000000e+00> : vector<8x32xf32>
    %108 = tpu.matmul %106, %107, %cst_68 {dimension_numbers = #tpu.dot_dimension_numbers<[1], [0], [0], [1], [0, 0, 1, 1], [], []>} : vector<8x32xbf16>, vector<32x32xbf16>, vector<8x32xf32> -> vector<8x32xf32>
    %c0_69 = arith.constant 0 : index
    %c0_70 = arith.constant 0 : index
    %109 = vector.load %arg22[%c0_69, %c0_70] : memref<1x32xf32, #tpu.memory_space<vmem>>, vector<1x32xf32>
    %110 = vector.broadcast %109 : vector<1x32xf32> to vector<8x32xf32>
    %111 = arith.addf %108, %110 : vector<8x32xf32>
    %c0_71 = arith.constant 0 : index
    %c0_72 = arith.constant 0 : index
    %112 = vector.load %arg7[%c0_71, %c0_72] : memref<8x24xbf16, #tpu.memory_space<vmem>>, vector<8x24xbf16>
    %113 = vector.extract_strided_slice %105 {offsets = [0, 0], sizes = [8, 12], strides = [1, 1]} : vector<8x24xf32> to vector<8x12xf32>
    %114 = arith.truncf %113 : vector<8x12xf32> to vector<8x12xbf16>
    %115 = vector.extract_strided_slice %112 {offsets = [0, 0], sizes = [8, 12], strides = [1, 1]} : vector<8x24xbf16> to vector<8x12xbf16>
    %cst_73 = arith.constant dense<0.000000e+00> : vector<8x8xf32>
    %116 = tpu.matmul %114, %115, %cst_73 {dimension_numbers = #tpu.dot_dimension_numbers<[1], [1], [0], [0], [0, 0, 1, 0], [], []>} : vector<8x12xbf16>, vector<8x12xbf16>, vector<8x8xf32> -> vector<8x8xf32>
    %cst_74 = arith.constant 0.288675129 : f32
    %117 = vector.broadcast %cst_74 : f32 to vector<8x8xf32>
    %118 = arith.mulf %116, %117 : vector<8x8xf32>
    %cst_75 = arith.constant dense<0xFF800000> : vector<8xf32>
    %119 = vector.multi_reduction <maximumf>, %118, %cst_75 [1] : vector<8x8xf32> to vector<8xf32>
    %120 = vector.shape_cast %119 : vector<8xf32> to vector<8x1xf32>
    %121 = vector.broadcast %120 : vector<8x1xf32> to vector<8x8xf32>
    %122 = arith.subf %118, %121 : vector<8x8xf32>
    %123 = math.exp %122 : vector<8x8xf32>
    %cst_76 = arith.constant dense<0.000000e+00> : vector<8xf32>
    %124 = vector.multi_reduction <add>, %123, %cst_76 [1] : vector<8x8xf32> to vector<8xf32>
    %125 = vector.shape_cast %124 : vector<8xf32> to vector<8x1xf32>
    %126 = tpu.reciprocal %125 {approx = true} : vector<8x1xf32> -> vector<8x1xf32>
    %127 = vector.broadcast %126 : vector<8x1xf32> to vector<8x8xf32>
    %128 = arith.mulf %123, %127 : vector<8x8xf32>
    %129 = vector.extract_strided_slice %111 {offsets = [0, 0], sizes = [8, 16], strides = [1, 1]} : vector<8x32xf32> to vector<8x16xf32>
    %130 = arith.truncf %129 : vector<8x16xf32> to vector<8x16xbf16>
    %131 = arith.truncf %128 : vector<8x8xf32> to vector<8x8xbf16>
    %cst_77 = arith.constant dense<0.000000e+00> : vector<8x16xf32>
    %132 = tpu.matmul %131, %130, %cst_77 {dimension_numbers = #tpu.dot_dimension_numbers<[1], [0], [0], [1], [0, 0, 1, 1], [], []>} : vector<8x8xbf16>, vector<8x16xbf16>, vector<8x16xf32> -> vector<8x16xf32>
    %133 = vector.extract_strided_slice %105 {offsets = [0, 12], sizes = [8, 12], strides = [1, 1]} : vector<8x24xf32> to vector<8x12xf32>
    %134 = arith.truncf %133 : vector<8x12xf32> to vector<8x12xbf16>
    %135 = vector.extract_strided_slice %112 {offsets = [0, 12], sizes = [8, 12], strides = [1, 1]} : vector<8x24xbf16> to vector<8x12xbf16>
    %cst_78 = arith.constant dense<0.000000e+00> : vector<8x8xf32>
    %136 = tpu.matmul %134, %135, %cst_78 {dimension_numbers = #tpu.dot_dimension_numbers<[1], [1], [0], [0], [0, 0, 1, 0], [], []>} : vector<8x12xbf16>, vector<8x12xbf16>, vector<8x8xf32> -> vector<8x8xf32>
    %cst_79 = arith.constant 0.288675129 : f32
    %137 = vector.broadcast %cst_79 : f32 to vector<8x8xf32>
    %138 = arith.mulf %136, %137 : vector<8x8xf32>
    %cst_80 = arith.constant dense<0xFF800000> : vector<8xf32>
    %139 = vector.multi_reduction <maximumf>, %138, %cst_80 [1] : vector<8x8xf32> to vector<8xf32>
    %140 = vector.shape_cast %139 : vector<8xf32> to vector<8x1xf32>
    %141 = vector.broadcast %140 : vector<8x1xf32> to vector<8x8xf32>
    %142 = arith.subf %138, %141 : vector<8x8xf32>
    %143 = math.exp %142 : vector<8x8xf32>
    %cst_81 = arith.constant dense<0.000000e+00> : vector<8xf32>
    %144 = vector.multi_reduction <add>, %143, %cst_81 [1] : vector<8x8xf32> to vector<8xf32>
    %145 = vector.shape_cast %144 : vector<8xf32> to vector<8x1xf32>
    %146 = tpu.reciprocal %145 {approx = true} : vector<8x1xf32> -> vector<8x1xf32>
    %147 = vector.broadcast %146 : vector<8x1xf32> to vector<8x8xf32>
    %148 = arith.mulf %143, %147 : vector<8x8xf32>
    %149 = vector.extract_strided_slice %111 {offsets = [0, 16], sizes = [8, 16], strides = [1, 1]} : vector<8x32xf32> to vector<8x16xf32>
    %150 = arith.truncf %149 : vector<8x16xf32> to vector<8x16xbf16>
    %151 = arith.truncf %148 : vector<8x8xf32> to vector<8x8xbf16>
    %cst_82 = arith.constant dense<0.000000e+00> : vector<8x16xf32>
    %152 = tpu.matmul %151, %150, %cst_82 {dimension_numbers = #tpu.dot_dimension_numbers<[1], [0], [0], [1], [0, 0, 1, 1], [], []>} : vector<8x8xbf16>, vector<8x16xbf16>, vector<8x16xf32> -> vector<8x16xf32>
    %153 = tpu.concatenate %132, %152 in 1 : vector<8x16xf32>, vector<8x16xf32> -> vector<8x32xf32>
    %154 = arith.truncf %153 : vector<8x32xf32> to vector<8x32xbf16>
    %c0_83 = arith.constant 0 : index
    %c0_84 = arith.constant 0 : index
    %155 = vector.load %arg23[%c0_83, %c0_84] : memref<32x32xbf16, #tpu.memory_space<vmem>>, vector<32x32xbf16>
    %cst_85 = arith.constant dense<0.000000e+00> : vector<8x32xf32>
    %156 = tpu.matmul %154, %155, %cst_85 {dimension_numbers = #tpu.dot_dimension_numbers<[1], [0], [0], [1], [0, 0, 1, 1], [], []>} : vector<8x32xbf16>, vector<32x32xbf16>, vector<8x32xf32> -> vector<8x32xf32>
    %c0_86 = arith.constant 0 : index
    %c0_87 = arith.constant 0 : index
    %157 = vector.load %arg24[%c0_86, %c0_87] : memref<1x32xf32, #tpu.memory_space<vmem>>, vector<1x32xf32>
    %158 = vector.broadcast %157 : vector<1x32xf32> to vector<8x32xf32>
    %159 = arith.addf %156, %158 : vector<8x32xf32>
    %160 = arith.addf %159, %31 : vector<8x32xf32>
    %161 = arith.truncf %160 : vector<8x32xf32> to vector<8x32xbf16>
    %c0_88 = arith.constant 0 : index
    %c0_89 = arith.constant 0 : index
    %162 = vector.load %arg25[%c0_88, %c0_89] : memref<32x64xbf16, #tpu.memory_space<vmem>>, vector<32x64xbf16>
    %cst_90 = arith.constant dense<0.000000e+00> : vector<8x64xf32>
    %163 = tpu.matmul %161, %162, %cst_90 {dimension_numbers = #tpu.dot_dimension_numbers<[1], [0], [0], [1], [0, 0, 1, 1], [], []>} : vector<8x32xbf16>, vector<32x64xbf16>, vector<8x64xf32> -> vector<8x64xf32>
    %c0_91 = arith.constant 0 : index
    %c0_92 = arith.constant 0 : index
    %c0_93 = arith.constant 0 : index
    %164 = vector.load %arg2[%c0_91, %c0_92, %c0_93] : memref<1x8x8xbf16, #tpu.memory_space<vmem>>, vector<1x8x8xbf16>
    %165 = vector.shape_cast %164 : vector<1x8x8xbf16> to vector<8x8xbf16>
    %c0_94 = arith.constant 0 : index
    %c0_95 = arith.constant 0 : index
    %166 = vector.load %arg26[%c0_94, %c0_95] : memref<8x64xbf16, #tpu.memory_space<vmem>>, vector<8x64xbf16>
    %cst_96 = arith.constant dense<0.000000e+00> : vector<8x64xf32>
    %167 = tpu.matmul %165, %166, %cst_96 {dimension_numbers = #tpu.dot_dimension_numbers<[1], [0], [0], [1], [0, 0, 1, 1], [], []>} : vector<8x8xbf16>, vector<8x64xbf16>, vector<8x64xf32> -> vector<8x64xf32>
    %168 = arith.addf %163, %167 : vector<8x64xf32>
    %c0_97 = arith.constant 0 : index
    %c0_98 = arith.constant 0 : index
    %169 = vector.load %arg27[%c0_97, %c0_98] : memref<1x64xf32, #tpu.memory_space<vmem>>, vector<1x64xf32>
    %170 = vector.broadcast %169 : vector<1x64xf32> to vector<8x64xf32>
    %171 = arith.addf %168, %170 : vector<8x64xf32>
    %cst_99 = arith.constant 0.000000e+00 : f32
    %172 = vector.broadcast %cst_99 : f32 to vector<8x64xf32>
    %173 = arith.maximumf %171, %172 : vector<8x64xf32>
    %174 = arith.truncf %173 : vector<8x64xf32> to vector<8x64xbf16>
    %c0_100 = arith.constant 0 : index
    %c0_101 = arith.constant 0 : index
    %175 = vector.load %arg28[%c0_100, %c0_101] : memref<64x256xbf16, #tpu.memory_space<vmem>>, vector<64x256xbf16>
    %cst_102 = arith.constant dense<0.000000e+00> : vector<8x256xf32>
    %176 = tpu.matmul %174, %175, %cst_102 {dimension_numbers = #tpu.dot_dimension_numbers<[1], [0], [0], [1], [0, 0, 1, 1], [], []>} : vector<8x64xbf16>, vector<64x256xbf16>, vector<8x256xf32> -> vector<8x256xf32>
    %c0_103 = arith.constant 0 : index
    %c0_104 = arith.constant 0 : index
    %177 = vector.load %arg29[%c0_103, %c0_104] : memref<1x256xf32, #tpu.memory_space<vmem>>, vector<1x256xf32>
    %178 = vector.broadcast %177 : vector<1x256xf32> to vector<8x256xf32>
    %179 = arith.addf %176, %178 : vector<8x256xf32>
    %180 = arith.negf %179 : vector<8x256xf32>
    %181 = math.exp %180 : vector<8x256xf32>
    %cst_105 = arith.constant 1.000000e+00 : f32
    %182 = vector.broadcast %cst_105 : f32 to vector<8x256xf32>
    %183 = arith.addf %182, %181 : vector<8x256xf32>
    %184 = arith.divf %182, %183 : vector<8x256xf32>
    %c0_106 = arith.constant 0 : index
    %c0_107 = arith.constant 0 : index
    %c0_108 = arith.constant 0 : index
    %185 = vector.load %arg31[%c0_106, %c0_107, %c0_108] : memref<1x8x256xf32, #tpu.memory_space<vmem>>, vector<1x8x256xf32>
    %186 = vector.shape_cast %185 : vector<1x8x256xf32> to vector<8x256xf32>
    %187 = vector.shape_cast %184 : vector<8x256xf32> to vector<1x8x256xf32>
    tpu.vector_store %arg31[%c0_106, %c0_107, %c0_108], %187 {strides = array<i32>} : memref<1x8x256xf32, #tpu.memory_space<vmem>>, vector<1x8x256xf32>,
    return
  }
  func.func @transform_0(%arg0: i32) -> (i32, i32, i32) {
    %c0_i32 = arith.constant 0 : i32
    %c0_i32_0 = arith.constant 0 : i32
    %c0_i32_1 = arith.constant 0 : i32
    return %arg0, %c0_i32, %c0_i32_0 : i32, i32, i32
  }
  func.func @transform_1(%arg0: i32) -> (i32, i32, i32) {
    %c0_i32 = arith.constant 0 : i32
    %c0_i32_0 = arith.constant 0 : i32
    %c0_i32_1 = arith.constant 0 : i32
    return %arg0, %c0_i32, %c0_i32_0 : i32, i32, i32
  }
  func.func @transform_2(%arg0: i32) -> (i32, i32, i32) {
    %c0_i32 = arith.constant 0 : i32
    %c0_i32_0 = arith.constant 0 : i32
    %c0_i32_1 = arith.constant 0 : i32
    return %arg0, %c0_i32, %c0_i32_0 : i32, i32, i32
  }
  func.func @transform_3(%arg0: i32) -> (i32, i32, i32) {
    %c0_i32 = arith.constant 0 : i32
    %c0_i32_0 = arith.constant 0 : i32
    %c0_i32_1 = arith.constant 0 : i32
    return %arg0, %c0_i32, %c0_i32_0 : i32, i32, i32
  }
  func.func @transform_4(%arg0: i32) -> (i32, i32, i32) {
    %c0_i32 = arith.constant 0 : i32
    %c0_i32_0 = arith.constant 0 : i32
    %c0_i32_1 = arith.constant 0 : i32
    return %arg0, %c0_i32, %c0_i32_0 : i32, i32, i32
  }
  func.func @transform_5(%arg0: i32) -> (i32, i32) {
    %c0_i32 = arith.constant 0 : i32
    %c0_i32_0 = arith.constant 0 : i32
    %c0_i32_1 = arith.constant 0 : i32
    return %c0_i32, %c0_i32_0 : i32, i32
  }
  func.func @transform_6(%arg0: i32) -> (i32, i32) {
    %c0_i32 = arith.constant 0 : i32
    %c0_i32_0 = arith.constant 0 : i32
    %c0_i32_1 = arith.constant 0 : i32
    return %c0_i32, %c0_i32_0 : i32, i32
  }
  func.func @transform_7(%arg0: i32) -> (i32, i32) {
    %c0_i32 = arith.constant 0 : i32
    %c0_i32_0 = arith.constant 0 : i32
    %c0_i32_1 = arith.constant 0 : i32
    return %c0_i32, %c0_i32_0 : i32, i32
  }
  func.func @transform_8(%arg0: i32) -> (i32, i32) {
    %c0_i32 = arith.constant 0 : i32
    %c0_i32_0 = arith.constant 0 : i32
    %c0_i32_1 = arith.constant 0 : i32
    return %c0_i32, %c0_i32_0 : i32, i32
  }
  func.func @transform_9(%arg0: i32) -> (i32, i32) {
    %c0_i32 = arith.constant 0 : i32
    %c0_i32_0 = arith.constant 0 : i32
    %c0_i32_1 = arith.constant 0 : i32
    return %c0_i32, %c0_i32_0 : i32, i32
  }
  func.func @transform_10(%arg0: i32) -> (i32, i32) {
    %c0_i32 = arith.constant 0 : i32
    %c0_i32_0 = arith.constant 0 : i32
    %c0_i32_1 = arith.constant 0 : i32
    return %c0_i32, %c0_i32_0 : i32, i32
  }
  func.func @transform_11(%arg0: i32) -> (i32, i32) {
    %c0_i32 = arith.constant 0 : i32
    %c0_i32_0 = arith.constant 0 : i32
    %c0_i32_1 = arith.constant 0 : i32
    return %c0_i32, %c0_i32_0 : i32, i32
  }
  func.func @transform_12(%arg0: i32) -> (i32, i32) {
    %c0_i32 = arith.constant 0 : i32
    %c0_i32_0 = arith.constant 0 : i32
    %c0_i32_1 = arith.constant 0 : i32
    return %c0_i32, %c0_i32_0 : i32, i32
  }
  func.func @transform_13(%arg0: i32) -> (i32, i32) {
    %c0_i32 = arith.constant 0 : i32
    %c0_i32_0 = arith.constant 0 : i32
    %c0_i32_1 = arith.constant 0 : i32
    return %c0_i32, %c0_i32_0 : i32, i32
  }
  func.func @transform_14(%arg0: i32) -> (i32, i32) {
    %c0_i32 = arith.constant 0 : i32
    %c0_i32_0 = arith.constant 0 : i32
    %c0_i32_1 = arith.constant 0 : i32
    return %c0_i32, %c0_i32_0 : i32, i32
  }
  func.func @transform_15(%arg0: i32) -> (i32, i32) {
    %c0_i32 = arith.constant 0 : i32
    %c0_i32_0 = arith.constant 0 : i32
    %c0_i32_1 = arith.constant 0 : i32
    return %c0_i32, %c0_i32_0 : i32, i32
  }
  func.func @transform_16(%arg0: i32) -> (i32, i32) {
    %c0_i32 = arith.constant 0 : i32
    %c0_i32_0 = arith.constant 0 : i32
    %c0_i32_1 = arith.constant 0 : i32
    return %c0_i32, %c0_i32_0 : i32, i32
  }
  func.func @transform_17(%arg0: i32) -> (i32, i32) {
    %c0_i32 = arith.constant 0 : i32
    %c0_i32_0 = arith.constant 0 : i32
    %c0_i32_1 = arith.constant 0 : i32
    return %c0_i32, %c0_i32_0 : i32, i32
  }
  func.func @transform_18(%arg0: i32) -> (i32, i32) {
    %c0_i32 = arith.constant 0 : i32
    %c0_i32_0 = arith.constant 0 : i32
    %c0_i32_1 = arith.constant 0 : i32
    return %c0_i32, %c0_i32_0 : i32, i32
  }
  func.func @transform_19(%arg0: i32) -> (i32, i32) {
    %c0_i32 = arith.constant 0 : i32
    %c0_i32_0 = arith.constant 0 : i32
    %c0_i32_1 = arith.constant 0 : i32
    return %c0_i32, %c0_i32_0 : i32, i32
  }
  func.func @transform_20(%arg0: i32) -> (i32, i32) {
    %c0_i32 = arith.constant 0 : i32
    %c0_i32_0 = arith.constant 0 : i32
    %c0_i32_1 = arith.constant 0 : i32
    return %c0_i32, %c0_i32_0 : i32, i32
  }
  func.func @transform_21(%arg0: i32) -> (i32, i32) {
    %c0_i32 = arith.constant 0 : i32
    %c0_i32_0 = arith.constant 0 : i32
    %c0_i32_1 = arith.constant 0 : i32
    return %c0_i32, %c0_i32_0 : i32, i32
  }
  func.func @transform_22(%arg0: i32) -> (i32, i32) {
    %c0_i32 = arith.constant 0 : i32
    %c0_i32_0 = arith.constant 0 : i32
    %c0_i32_1 = arith.constant 0 : i32
    return %c0_i32, %c0_i32_0 : i32, i32
  }
  func.func @transform_23(%arg0: i32) -> (i32, i32) {
    %c0_i32 = arith.constant 0 : i32
    %c0_i32_0 = arith.constant 0 : i32
    %c0_i32_1 = arith.constant 0 : i32
    return %c0_i32, %c0_i32_0 : i32, i32
  }
  func.func @transform_24(%arg0: i32) -> (i32, i32) {
    %c0_i32 = arith.constant 0 : i32
    %c0_i32_0 = arith.constant 0 : i32
    %c0_i32_1 = arith.constant 0 : i32
    return %c0_i32, %c0_i32_0 : i32, i32
  }
  func.func @transform_25(%arg0: i32) -> (i32, i32) {
    %c0_i32 = arith.constant 0 : i32
    %c0_i32_0 = arith.constant 0 : i32
    %c0_i32_1 = arith.constant 0 : i32
    return %c0_i32, %c0_i32_0 : i32, i32
  }
  func.func @transform_26(%arg0: i32) -> (i32, i32) {
    %c0_i32 = arith.constant 0 : i32
    %c0_i32_0 = arith.constant 0 : i32
    %c0_i32_1 = arith.constant 0 : i32
    return %c0_i32, %c0_i32_0 : i32, i32
  }
  func.func @transform_27(%arg0: i32) -> (i32, i32) {
    %c0_i32 = arith.constant 0 : i32
    %c0_i32_0 = arith.constant 0 : i32
    %c0_i32_1 = arith.constant 0 : i32
    return %c0_i32, %c0_i32_0 : i32, i32
  }
  func.func @transform_28(%arg0: i32) -> (i32, i32) {
    %c0_i32 = arith.constant 0 : i32
    %c0_i32_0 = arith.constant 0 : i32
    %c0_i32_1 = arith.constant 0 : i32
    return %c0_i32, %c0_i32_0 : i32, i32
  }
  func.func @transform_29(%arg0: i32) -> (i32, i32, i32) {
    %c0_i32 = arith.constant 0 : i32
    %c0_i32_0 = arith.constant 0 : i32
    %c0_i32_1 = arith.constant 0 : i32
    return %arg0, %c0_i32, %c0_i32_0 : i32, i32, i32
  }
  func.func @transform_30(%arg0: i32) -> (i32, i32, i32) {
    %c0_i32 = arith.constant 0 : i32
    %c0_i32_0 = arith.constant 0 : i32
    %c0_i32_1 = arith.constant 0 : i32
    return %arg0, %c0_i32, %c0_i32_0 : i32, i32, i32
  }
}

</mosaic_0001>

<llo_original>
// kernel: catcon_forward.1
$region0: #{catcon_forward.1}
  #allocation0 [shape = 'u32[]', space=smem, size = 0x4, offset = 0x4, fixed_abs, tag = 'smem constant byte address 0x4 - core index']
  #allocation1 [shape = 'u32[72,128]{1,0:T(1,128)}', space=vmem, size = 0x9000, scoped, tag = 'internal scratch']
  %s0 = inlined_call_operand.smem [shape: u32[31], index: -1, kind: input, shape index: {}]
  %s1 = sld [smem:[%s0]]
  %s2 = scalar_lea.smem %s0, 1
  %s3 = sld [smem:[%s2]]
  %s4 = scalar_lea.smem %s0, 2
  %s5 = sld [smem:[%s4]]
  %s6 = scalar_lea.smem %s0, 3
  %s7 = sld [smem:[%s6]]
  %s8 = scalar_lea.smem %s0, 4
  %s9 = sld [smem:[%s8]]
  %s10 = scalar_lea.smem %s0, 5
  %s11 = sld [smem:[%s10]]
  %s12 = scalar_lea.smem %s0, 6
  %s13 = sld [smem:[%s12]]
  %s14 = scalar_lea.smem %s0, 7
  %s15 = sld [smem:[%s14]]
  %s16 = scalar_lea.smem %s0, 8
  %s17 = sld [smem:[%s16]]
  %s18 = scalar_lea.smem %s0, 9
  %s19 = sld [smem:[%s18]]
  %s20 = scalar_lea.smem %s0, 10
  %s21 = sld [smem:[%s20]]
  %s22 = scalar_lea.smem %s0, 11
  %s23 = sld [smem:[%s22]]
  %s24 = scalar_lea.smem %s0, 12
  %s25 = sld [smem:[%s24]]
  %s26 = scalar_lea.smem %s0, 13
  %s27 = sld [smem:[%s26]]
  %s28 = scalar_lea.smem %s0, 14
  %s29 = sld [smem:[%s28]]
  %s30 = scalar_lea.smem %s0, 15
  %s31 = sld [smem:[%s30]]
  %s32 = scalar_lea.smem %s0, 16
  %s33 = sld [smem:[%s32]]
  %s34 = scalar_lea.smem %s0, 17
  %s35 = sld [smem:[%s34]]
  %s36 = scalar_lea.smem %s0, 18
  %s37 = sld [smem:[%s36]]
  %s38 = scalar_lea.smem %s0, 19
  %s39 = sld [smem:[%s38]]
  %s40 = scalar_lea.smem %s0, 20
  %s41 = sld [smem:[%s40]]
  %s42 = scalar_lea.smem %s0, 21
  %s43 = sld [smem:[%s42]]
  %s44 = scalar_lea.smem %s0, 22
  %s45 = sld [smem:[%s44]]
  %s46 = scalar_lea.smem %s0, 23
  %s47 = sld [smem:[%s46]]
  %s48 = scalar_lea.smem %s0, 24
  %s49 = sld [smem:[%s48]]
  %s50 = scalar_lea.smem %s0, 25
  %s51 = sld [smem:[%s50]]
  %s52 = scalar_lea.smem %s0, 26
  %s53 = sld [smem:[%s52]]
  %s54 = scalar_lea.smem %s0, 27
  %s55 = sld [smem:[%s54]]
  %s56 = scalar_lea.smem %s0, 28
  %s57 = sld [smem:[%s56]]
  %s58 = scalar_lea.smem %s0, 29
  %s59 = sld [smem:[%s58]]
  %s60 = scalar_lea.smem %s0, 30
  %s61 = sld [smem:[%s60]]
  %62 = xla_tuple %s59, %s61
  %s63 = sld [smem:[#allocation0]]
  $region157: #{catcon_forward.1} parent=0
    _
  %s65 = ssub.s32 1, %s63
  %s66 = scalar_select 0, %s65, %s63
  loop: start=0, step=1, limit=4
  $region2: #{catcon_forward.1} parent=0 // loop_pre_header
    _
  $region3: #{catcon_forward.1} parent=0 // loop_header
    %s68 = sphi 0, %s72
    %p69 = scmp.ge.s32.totalorder %s68, 4
    %s78 = sphi 0, %s80
    %s81 = sphi 0, %s78
    %s82 = sphi 0, %s81
    %s98 = sphi 0, %s82
    %s104 = sphi 0, %s106
    %s107 = sphi 0, %s104
    %s108 = sphi 0, %s107
    %s124 = sphi 0, %s108
    %s130 = sphi 0, %s132
    %s133 = sphi 0, %s130
    %s134 = sphi 0, %s133
    %s150 = sphi 0, %s134
    %s156 = sphi 0, %s158
    %s159 = sphi 0, %s156
    %s160 = sphi 0, %s159
    %s176 = sphi 0, %s160
    %s182 = sphi 0, %s184
    %s185 = sphi 0, %s182
    %s186 = sphi 0, %s185
    %s202 = sphi 0, %s186
    %s206 = sphi 0, %s206
    %s208 = sphi 0, %s206
    %s209 = sphi 0, %s208
    %s223 = sphi 0, %s209
    %s227 = sphi 0, %s227
    %s229 = sphi 0, %s227
    %s230 = sphi 0, %s229
    %s244 = sphi 0, %s230
    %s248 = sphi 0, %s248
    %s250 = sphi 0, %s248
    %s251 = sphi 0, %s250
    %s265 = sphi 0, %s251
    %s269 = sphi 0, %s269
    %s271 = sphi 0, %s269
    %s272 = sphi 0, %s271
    %s286 = sphi 0, %s272
    %s290 = sphi 0, %s290
    %s292 = sphi 0, %s290
    %s293 = sphi 0, %s292
    %s307 = sphi 0, %s293
    %s311 = sphi 0, %s311
    %s313 = sphi 0, %s311
    %s314 = sphi 0, %s313
    %s328 = sphi 0, %s314
    %s332 = sphi 0, %s332
    %s334 = sphi 0, %s332
    %s335 = sphi 0, %s334
    %s349 = sphi 0, %s335
    %s353 = sphi 0, %s353
    %s355 = sphi 0, %s353
    %s356 = sphi 0, %s355
    %s370 = sphi 0, %s356
    %s374 = sphi 0, %s374
    %s376 = sphi 0, %s374
    %s377 = sphi 0, %s376
    %s391 = sphi 0, %s377
    %s395 = sphi 0, %s395
    %s397 = sphi 0, %s395
    %s398 = sphi 0, %s397
    %s412 = sphi 0, %s398
    %s416 = sphi 0, %s416
    %s418 = sphi 0, %s416
    %s419 = sphi 0, %s418
    %s433 = sphi 0, %s419
    %s437 = sphi 0, %s437
    %s439 = sphi 0, %s437
    %s440 = sphi 0, %s439
    %s454 = sphi 0, %s440
    %s458 = sphi 0, %s458
    %s460 = sphi 0, %s458
    %s461 = sphi 0, %s460
    %s475 = sphi 0, %s461
    %s479 = sphi 0, %s479
    %s481 = sphi 0, %s479
    %s482 = sphi 0, %s481
    %s496 = sphi 0, %s482
    %s500 = sphi 0, %s500
    %s502 = sphi 0, %s500
    %s503 = sphi 0, %s502
    %s517 = sphi 0, %s503
    %s521 = sphi 0, %s521
    %s523 = sphi 0, %s521
    %s524 = sphi 0, %s523
    %s538 = sphi 0, %s524
    %s542 = sphi 0, %s542
    %s544 = sphi 0, %s542
    %s545 = sphi 0, %s544
    %s559 = sphi 0, %s545
    %s563 = sphi 0, %s563
    %s565 = sphi 0, %s563
    %s566 = sphi 0, %s565
    %s580 = sphi 0, %s566
    %s584 = sphi 0, %s584
    %s586 = sphi 0, %s584
    %s587 = sphi 0, %s586
    %s601 = sphi 0, %s587
    %s605 = sphi 0, %s605
    %s607 = sphi 0, %s605
    %s608 = sphi 0, %s607
    %s622 = sphi 0, %s608
    %s626 = sphi 0, %s626
    %s628 = sphi 0, %s626
    %s629 = sphi 0, %s628
    %s643 = sphi 0, %s629
    %s647 = sphi 0, %s647
    %s649 = sphi 0, %s647
    %s650 = sphi 0, %s649
    %s664 = sphi 0, %s650
    %s668 = sphi 0, %s668
    %s670 = sphi 0, %s668
    %s671 = sphi 0, %s670
    %s685 = sphi 0, %s671
    %s689 = sphi 0, %s689
    %s691 = sphi 0, %s689
    %s692 = sphi 0, %s691
    %s706 = sphi 0, %s692
    %s712 = sphi 0, %s714
    %s715 = sphi 0, %s712
    %s716 = sphi 0, %s715
    %s732 = sphi 0, %s716
    %s738 = sphi 0, %s740
    %s741 = sphi 0, %s738
    %s742 = sphi 0, %s741
    %s758 = sphi 0, %s742
  $region4: #{catcon_forward.1} parent=0 // loop_header_branch
    %71 = sbr.rel (%p69) target = $region8
  $region5: #{catcon_forward.1} parent=0 // loop_body
    %s73 = ssub.s32 %s68, 1
    %s74 = ssub.s32 %s68, 2
    %s75 = sadd.s32 %s68, 1
    %s76 = ssub.s32 %s68, %s75
    %p77 = scmp.eq.s32.totalorder %s76, 0
    %s79 = sadd.s32 %s78, 1
    %s80 = scalar_select %p77, %s78, %s79
    %p83 = pneg %p77
    %p84 = scmp.eq.s32.totalorder %s68, 1
    %p85 = por %p83, %p84
    %p86 = scmp.ne.s32.totalorder %s78, %s81
    %p87 = scmp.eq.s32.totalorder %s68, 0
    %p88 = por %p86, %p87
    %p89 = scmp.ne.s32.totalorder %s78, %s81
    %p90 = scmp.eq.s32.totalorder %s73, 1
    %p91 = por %p89, %p90
    %p92 = scmp.ne.s32.totalorder %s81, %s82
    %p93 = scmp.eq.s32.totalorder %s73, 0
    %p94 = por %p92, %p93
    %p95 = scmp.ne.s32.totalorder %s81, %s82
    %p96 = scmp.eq.s32.totalorder %s74, 1
    %p97 = por %p95, %p96
    %p99 = scmp.ne.s32.totalorder %s82, %s98
    %p100 = scmp.eq.s32.totalorder %s74, 0
    %p101 = por %p99, %p100
    %s102 = ssub.s32 %s68, %s75
    %p103 = scmp.eq.s32.totalorder %s102, 0
    %s105 = sadd.s32 %s104, 1
    %s106 = scalar_select %p103, %s104, %s105
    %p109 = pneg %p103
    %p110 = scmp.eq.s32.totalorder %s68, 1
    %p111 = por %p109, %p110
    %p112 = scmp.ne.s32.totalorder %s104, %s107
    %p113 = scmp.eq.s32.totalorder %s68, 0
    %p114 = por %p112, %p113
    %p115 = scmp.ne.s32.totalorder %s104, %s107
    %p116 = scmp.eq.s32.totalorder %s73, 1
    %p117 = por %p115, %p116
    %p118 = scmp.ne.s32.totalorder %s107, %s108
    %p119 = scmp.eq.s32.totalorder %s73, 0
    %p120 = por %p118, %p119
    %p121 = scmp.ne.s32.totalorder %s107, %s108
    %p122 = scmp.eq.s32.totalorder %s74, 1
    %p123 = por %p121, %p122
    %p125 = scmp.ne.s32.totalorder %s108, %s124
    %p126 = scmp.eq.s32.totalorder %s74, 0
    %p127 = por %p125, %p126
    %s128 = ssub.s32 %s68, %s75
    %p129 = scmp.eq.s32.totalorder %s128, 0
    %s131 = sadd.s32 %s130, 1
    %s132 = scalar_select %p129, %s130, %s131
    %p135 = pneg %p129
    %p136 = scmp.eq.s32.totalorder %s68, 1
    %p137 = por %p135, %p136
    %p138 = scmp.ne.s32.totalorder %s130, %s133
    %p139 = scmp.eq.s32.totalorder %s68, 0
    %p140 = por %p138, %p139
    %p141 = scmp.ne.s32.totalorder %s130, %s133
    %p142 = scmp.eq.s32.totalorder %s73, 1
    %p143 = por %p141, %p142
    %p144 = scmp.ne.s32.totalorder %s133, %s134
    %p145 = scmp.eq.s32.totalorder %s73, 0
    %p146 = por %p144, %p145
    %p147 = scmp.ne.s32.totalorder %s133, %s134
    %p148 = scmp.eq.s32.totalorder %s74, 1
    %p149 = por %p147, %p148
    %p151 = scmp.ne.s32.totalorder %s134, %s150
    %p152 = scmp.eq.s32.totalorder %s74, 0
    %p153 = por %p151, %p152
    %s154 = ssub.s32 %s68, %s75
    %p155 = scmp.eq.s32.totalorder %s154, 0
    %s157 = sadd.s32 %s156, 1
    %s158 = scalar_select %p155, %s156, %s157
    %p161 = pneg %p155
    %p162 = scmp.eq.s32.totalorder %s68, 1
    %p163 = por %p161, %p162
    %p164 = scmp.ne.s32.totalorder %s156, %s159
    %p165 = scmp.eq.s32.totalorder %s68, 0
    %p166 = por %p164, %p165
    %p167 = scmp.ne.s32.totalorder %s156, %s159
    %p168 = scmp.eq.s32.totalorder %s73, 1
    %p169 = por %p167, %p168
    %p170 = scmp.ne.s32.totalorder %s159, %s160
    %p171 = scmp.eq.s32.totalorder %s73, 0
    %p172 = por %p170, %p171
    %p173 = scmp.ne.s32.totalorder %s159, %s160
    %p174 = scmp.eq.s32.totalorder %s74, 1
    %p175 = por %p173, %p174
    %p177 = scmp.ne.s32.totalorder %s160, %s176
    %p178 = scmp.eq.s32.totalorder %s74, 0
    %p179 = por %p177, %p178
    %s180 = ssub.s32 %s68, %s75
    %p181 = scmp.eq.s32.totalorder %s180, 0
    %s183 = sadd.s32 %s182, 1
    %s184 = scalar_select %p181, %s182, %s183
    %p187 = pneg %p181
    %p188 = scmp.eq.s32.totalorder %s68, 1
    %p189 = por %p187, %p188
    %p190 = scmp.ne.s32.totalorder %s182, %s185
    %p191 = scmp.eq.s32.totalorder %s68, 0
    %p192 = por %p190, %p191
    %p193 = scmp.ne.s32.totalorder %s182, %s185
    %p194 = scmp.eq.s32.totalorder %s73, 1
    %p195 = por %p193, %p194
    %p196 = scmp.ne.s32.totalorder %s185, %s186
    %p197 = scmp.eq.s32.totalorder %s73, 0
    %p198 = por %p196, %p197
    %p199 = scmp.ne.s32.totalorder %s185, %s186
    %p200 = scmp.eq.s32.totalorder %s74, 1
    %p201 = por %p199, %p200
    %p203 = scmp.ne.s32.totalorder %s186, %s202
    %p204 = scmp.eq.s32.totalorder %s74, 0
    %p205 = por %p203, %p204
    %s207 = sadd.s32 %s206, 1
    %p210 = scmp.eq.s32.totalorder %s68, 1
    %p211 = scmp.ne.s32.totalorder %s206, %s208
    %p212 = scmp.eq.s32.totalorder %s68, 0
    %p213 = por %p211, %p212
    %p214 = scmp.ne.s32.totalorder %s206, %s208
    %p215 = scmp.eq.s32.totalorder %s73, 1
    %p216 = por %p214, %p215
    %p217 = scmp.ne.s32.totalorder %s208, %s209
    %p218 = scmp.eq.s32.totalorder %s73, 0
    %p219 = por %p217, %p218
    %p220 = scmp.ne.s32.totalorder %s208, %s209
    %p221 = scmp.eq.s32.totalorder %s74, 1
    %p222 = por %p220, %p221
    %p224 = scmp.ne.s32.totalorder %s209, %s223
    %p225 = scmp.eq.s32.totalorder %s74, 0
    %p226 = por %p224, %p225
    %s228 = sadd.s32 %s227, 1
    %p231 = scmp.eq.s32.totalorder %s68, 1
    %p232 = scmp.ne.s32.totalorder %s227, %s229
    %p233 = scmp.eq.s32.totalorder %s68, 0
    %p234 = por %p232, %p233
    %p235 = scmp.ne.s32.totalorder %s227, %s229
    %p236 = scmp.eq.s32.totalorder %s73, 1
    %p237 = por %p235, %p236
    %p238 = scmp.ne.s32.totalorder %s229, %s230
    %p239 = scmp.eq.s32.totalorder %s73, 0
    %p240 = por %p238, %p239
    %p241 = scmp.ne.s32.totalorder %s229, %s230
    %p242 = scmp.eq.s32.totalorder %s74, 1
    %p243 = por %p241, %p242
    %p245 = scmp.ne.s32.totalorder %s230, %s244
    %p246 = scmp.eq.s32.totalorder %s74, 0
    %p247 = por %p245, %p246
    %s249 = sadd.s32 %s248, 1
    %p252 = scmp.eq.s32.totalorder %s68, 1
    %p253 = scmp.ne.s32.totalorder %s248, %s250
    %p254 = scmp.eq.s32.totalorder %s68, 0
    %p255 = por %p253, %p254
    %p256 = scmp.ne.s32.totalorder %s248, %s250
    %p257 = scmp.eq.s32.totalorder %s73, 1
    %p258 = por %p256, %p257
    %p259 = scmp.ne.s32.totalorder %s250, %s251
    %p260 = scmp.eq.s32.totalorder %s73, 0
    %p261 = por %p259, %p260
    %p262 = scmp.ne.s32.totalorder %s250, %s251
    %p263 = scmp.eq.s32.totalorder %s74, 1
    %p264 = por %p262, %p263
    %p266 = scmp.ne.s32.totalorder %s251, %s265
    %p267 = scmp.eq.s32.totalorder %s74, 0
    %p268 = por %p266, %p267
    %s270 = sadd.s32 %s269, 1
    %p273 = scmp.eq.s32.totalorder %s68, 1
    %p274 = scmp.ne.s32.totalorder %s269, %s271
    %p275 = scmp.eq.s32.totalorder %s68, 0
    %p276 = por %p274, %p275
    %p277 = scmp.ne.s32.totalorder %s269, %s271
    %p278 = scmp.eq.s32.totalorder %s73, 1
    %p279 = por %p277, %p278
    %p280 = scmp.ne.s32.totalorder %s271, %s272
    %p281 = scmp.eq.s32.totalorder %s73, 0
    %p282 = por %p280, %p281
    %p283 = scmp.ne.s32.totalorder %s271, %s272
    %p284 = scmp.eq.s32.totalorder %s74, 1
    %p285 = por %p283, %p284
    %p287 = scmp.ne.s32.totalorder %s272, %s286
    %p288 = scmp.eq.s32.totalorder %s74, 0
    %p289 = por %p287, %p288
    %s291 = sadd.s32 %s290, 1
    %p294 = scmp.eq.s32.totalorder %s68, 1
    %p295 = scmp.ne.s32.totalorder %s290, %s292
    %p296 = scmp.eq.s32.totalorder %s68, 0
    %p297 = por %p295, %p296
    %p298 = scmp.ne.s32.totalorder %s290, %s292
    %p299 = scmp.eq.s32.totalorder %s73, 1
    %p300 = por %p298, %p299
    %p301 = scmp.ne.s32.totalorder %s292, %s293
    %p302 = scmp.eq.s32.totalorder %s73, 0
    %p303 = por %p301, %p302
    %p304 = scmp.ne.s32.totalorder %s292, %s293
    %p305 = scmp.eq.s32.totalorder %s74, 1
    %p306 = por %p304, %p305
    %p308 = scmp.ne.s32.totalorder %s293, %s307
    %p309 = scmp.eq.s32.totalorder %s74, 0
    %p310 = por %p308, %p309
    %s312 = sadd.s32 %s311, 1
    %p315 = scmp.eq.s32.totalorder %s68, 1
    %p316 = scmp.ne.s32.totalorder %s311, %s313
    %p317 = scmp.eq.s32.totalorder %s68, 0
    %p318 = por %p316, %p317
    %p319 = scmp.ne.s32.totalorder %s311, %s313
    %p320 = scmp.eq.s32.totalorder %s73, 1
    %p321 = por %p319, %p320
    %p322 = scmp.ne.s32.totalorder %s313, %s314
    %p323 = scmp.eq.s32.totalorder %s73, 0
    %p324 = por %p322, %p323
    %p325 = scmp.ne.s32.totalorder %s313, %s314
    %p326 = scmp.eq.s32.totalorder %s74, 1
    %p327 = por %p325, %p326
    %p329 = scmp.ne.s32.totalorder %s314, %s328
    %p330 = scmp.eq.s32.totalorder %s74, 0
    %p331 = por %p329, %p330
    %s333 = sadd.s32 %s332, 1
    %p336 = scmp.eq.s32.totalorder %s68, 1
    %p337 = scmp.ne.s32.totalorder %s332, %s334
    %p338 = scmp.eq.s32.totalorder %s68, 0
    %p339 = por %p337, %p338
    %p340 = scmp.ne.s32.totalorder %s332, %s334
    %p341 = scmp.eq.s32.totalorder %s73, 1
    %p342 = por %p340, %p341
    %p343 = scmp.ne.s32.totalorder %s334, %s335
    %p344 = scmp.eq.s32.totalorder %s73, 0
    %p345 = por %p343, %p344
    %p346 = scmp.ne.s32.totalorder %s334, %s335
    %p347 = scmp.eq.s32.totalorder %s74, 1
    %p348 = por %p346, %p347
    %p350 = scmp.ne.s32.totalorder %s335, %s349
    %p351 = scmp.eq.s32.totalorder %s74, 0
    %p352 = por %p350, %p351
    %s354 = sadd.s32 %s353, 1
    %p357 = scmp.eq.s32.totalorder %s68, 1
    %p358 = scmp.ne.s32.totalorder %s353, %s355
    %p359 = scmp.eq.s32.totalorder %s68, 0
    %p360 = por %p358, %p359
    %p361 = scmp.ne.s32.totalorder %s353, %s355
    %p362 = scmp.eq.s32.totalorder %s73, 1
    %p363 = por %p361, %p362
    %p364 = scmp.ne.s32.totalorder %s355, %s356
    %p365 = scmp.eq.s32.totalorder %s73, 0
    %p366 = por %p364, %p365
    %p367 = scmp.ne.s32.totalorder %s355, %s356
    %p368 = scmp.eq.s32.totalorder %s74, 1
    %p369 = por %p367, %p368
    %p371 = scmp.ne.s32.totalorder %s356, %s370
    %p372 = scmp.eq.s32.totalorder %s74, 0
    %p373 = por %p371, %p372
    %s375 = sadd.s32 %s374, 1
    %p378 = scmp.eq.s32.totalorder %s68, 1
    %p379 = scmp.ne.s32.totalorder %s374, %s376
    %p380 = scmp.eq.s32.totalorder %s68, 0
    %p381 = por %p379, %p380
    %p382 = scmp.ne.s32.totalorder %s374, %s376
    %p383 = scmp.eq.s32.totalorder %s73, 1
    %p384 = por %p382, %p383
    %p385 = scmp.ne.s32.totalorder %s376, %s377
    %p386 = scmp.eq.s32.totalorder %s73, 0
    %p387 = por %p385, %p386
    %p388 = scmp.ne.s32.totalorder %s376, %s377
    %p389 = scmp.eq.s32.totalorder %s74, 1
    %p390 = por %p388, %p389
    %p392 = scmp.ne.s32.totalorder %s377, %s391
    %p393 = scmp.eq.s32.totalorder %s74, 0
    %p394 = por %p392, %p393
    %s396 = sadd.s32 %s395, 1
    %p399 = scmp.eq.s32.totalorder %s68, 1
    %p400 = scmp.ne.s32.totalorder %s395, %s397
    %p401 = scmp.eq.s32.totalorder %s68, 0
    %p402 = por %p400, %p401
    %p403 = scmp.ne.s32.totalorder %s395, %s397
    %p404 = scmp.eq.s32.totalorder %s73, 1
    %p405 = por %p403, %p404
    %p406 = scmp.ne.s32.totalorder %s397, %s398
    %p407 = scmp.eq.s32.totalorder %s73, 0
    %p408 = por %p406, %p407
    %p409 = scmp.ne.s32.totalorder %s397, %s398
    %p410 = scmp.eq.s32.totalorder %s74, 1
    %p411 = por %p409, %p410
    %p413 = scmp.ne.s32.totalorder %s398, %s412
    %p414 = scmp.eq.s32.totalorder %s74, 0
    %p415 = por %p413, %p414
    %s417 = sadd.s32 %s416, 1
    %p420 = scmp.eq.s32.totalorder %s68, 1
    %p421 = scmp.ne.s32.totalorder %s416, %s418
    %p422 = scmp.eq.s32.totalorder %s68, 0
    %p423 = por %p421, %p422
    %p424 = scmp.ne.s32.totalorder %s416, %s418
    %p425 = scmp.eq.s32.totalorder %s73, 1
    %p426 = por %p424, %p425
    %p427 = scmp.ne.s32.totalorder %s418, %s419
    %p428 = scmp.eq.s32.totalorder %s73, 0
    %p429 = por %p427, %p428
    %p430 = scmp.ne.s32.totalorder %s418, %s419
    %p431 = scmp.eq.s32.totalorder %s74, 1
    %p432 = por %p430, %p431
    %p434 = scmp.ne.s32.totalorder %s419, %s433
    %p435 = scmp.eq.s32.totalorder %s74, 0
    %p436 = por %p434, %p435
    %s438 = sadd.s32 %s437, 1
    %p441 = scmp.eq.s32.totalorder %s68, 1
    %p442 = scmp.ne.s32.totalorder %s437, %s439
    %p443 = scmp.eq.s32.totalorder %s68, 0
    %p444 = por %p442, %p443
    %p445 = scmp.ne.s32.totalorder %s437, %s439
    %p446 = scmp.eq.s32.totalorder %s73, 1
    %p447 = por %p445, %p446
    %p448 = scmp.ne.s32.totalorder %s439, %s440
    %p449 = scmp.eq.s32.totalorder %s73, 0
    %p450 = por %p448, %p449
    %p451 = scmp.ne.s32.totalorder %s439, %s440
    %p452 = scmp.eq.s32.totalorder %s74, 1
    %p453 = por %p451, %p452
    %p455 = scmp.ne.s32.totalorder %s440, %s454
    %p456 = scmp.eq.s32.totalorder %s74, 0
    %p457 = por %p455, %p456
    %s459 = sadd.s32 %s458, 1
    %p462 = scmp.eq.s32.totalorder %s68, 1
    %p463 = scmp.ne.s32.totalorder %s458, %s460
    %p464 = scmp.eq.s32.totalorder %s68, 0
    %p465 = por %p463, %p464
    %p466 = scmp.ne.s32.totalorder %s458, %s460
    %p467 = scmp.eq.s32.totalorder %s73, 1
    %p468 = por %p466, %p467
    %p469 = scmp.ne.s32.totalorder %s460, %s461
    %p470 = scmp.eq.s32.totalorder %s73, 0
    %p471 = por %p469, %p470
    %p472 = scmp.ne.s32.totalorder %s460, %s461
    %p473 = scmp.eq.s32.totalorder %s74, 1
    %p474 = por %p472, %p473
    %p476 = scmp.ne.s32.totalorder %s461, %s475
    %p477 = scmp.eq.s32.totalorder %s74, 0
    %p478 = por %p476, %p477
    %s480 = sadd.s32 %s479, 1
    %p483 = scmp.eq.s32.totalorder %s68, 1
    %p484 = scmp.ne.s32.totalorder %s479, %s481
    %p485 = scmp.eq.s32.totalorder %s68, 0
    %p486 = por %p484, %p485
    %p487 = scmp.ne.s32.totalorder %s479, %s481
    %p488 = scmp.eq.s32.totalorder %s73, 1
    %p489 = por %p487, %p488
    %p490 = scmp.ne.s32.totalorder %s481, %s482
    %p491 = scmp.eq.s32.totalorder %s73, 0
    %p492 = por %p490, %p491
    %p493 = scmp.ne.s32.totalorder %s481, %s482
    %p494 = scmp.eq.s32.totalorder %s74, 1
    %p495 = por %p493, %p494
    %p497 = scmp.ne.s32.totalorder %s482, %s496
    %p498 = scmp.eq.s32.totalorder %s74, 0
    %p499 = por %p497, %p498
    %s501 = sadd.s32 %s500, 1
    %p504 = scmp.eq.s32.totalorder %s68, 1
    %p505 = scmp.ne.s32.totalorder %s500, %s502
    %p506 = scmp.eq.s32.totalorder %s68, 0
    %p507 = por %p505, %p506
    %p508 = scmp.ne.s32.totalorder %s500, %s502
    %p509 = scmp.eq.s32.totalorder %s73, 1
    %p510 = por %p508, %p509
    %p511 = scmp.ne.s32.totalorder %s502, %s503
    %p512 = scmp.eq.s32.totalorder %s73, 0
    %p513 = por %p511, %p512
    %p514 = scmp.ne.s32.totalorder %s502, %s503
    %p515 = scmp.eq.s32.totalorder %s74, 1
    %p516 = por %p514, %p515
    %p518 = scmp.ne.s32.totalorder %s503, %s517
    %p519 = scmp.eq.s32.totalorder %s74, 0
    %p520 = por %p518, %p519
    %s522 = sadd.s32 %s521, 1
    %p525 = scmp.eq.s32.totalorder %s68, 1
    %p526 = scmp.ne.s32.totalorder %s521, %s523
    %p527 = scmp.eq.s32.totalorder %s68, 0
    %p528 = por %p526, %p527
    %p529 = scmp.ne.s32.totalorder %s521, %s523
    %p530 = scmp.eq.s32.totalorder %s73, 1
    %p531 = por %p529, %p530
    %p532 = scmp.ne.s32.totalorder %s523, %s524
    %p533 = scmp.eq.s32.totalorder %s73, 0
    %p534 = por %p532, %p533
    %p535 = scmp.ne.s32.totalorder %s523, %s524
    %p536 = scmp.eq.s32.totalorder %s74, 1
    %p537 = por %p535, %p536
    %p539 = scmp.ne.s32.totalorder %s524, %s538
    %p540 = scmp.eq.s32.totalorder %s74, 0
    %p541 = por %p539, %p540
    %s543 = sadd.s32 %s542, 1
    %p546 = scmp.eq.s32.totalorder %s68, 1
    %p547 = scmp.ne.s32.totalorder %s542, %s544
    %p548 = scmp.eq.s32.totalorder %s68, 0
    %p549 = por %p547, %p548
    %p550 = scmp.ne.s32.totalorder %s542, %s544
    %p551 = scmp.eq.s32.totalorder %s73, 1
    %p552 = por %p550, %p551
    %p553 = scmp.ne.s32.totalorder %s544, %s545
    %p554 = scmp.eq.s32.totalorder %s73, 0
    %p555 = por %p553, %p554
    %p556 = scmp.ne.s32.totalorder %s544, %s545
    %p557 = scmp.eq.s32.totalorder %s74, 1
    %p558 = por %p556, %p557
    %p560 = scmp.ne.s32.totalorder %s545, %s559
    %p561 = scmp.eq.s32.totalorder %s74, 0
    %p562 = por %p560, %p561
    %s564 = sadd.s32 %s563, 1
    %p567 = scmp.eq.s32.totalorder %s68, 1
    %p568 = scmp.ne.s32.totalorder %s563, %s565
    %p569 = scmp.eq.s32.totalorder %s68, 0
    %p570 = por %p568, %p569
    %p571 = scmp.ne.s32.totalorder %s563, %s565
    %p572 = scmp.eq.s32.totalorder %s73, 1
    %p573 = por %p571, %p572
    %p574 = scmp.ne.s32.totalorder %s565, %s566
    %p575 = scmp.eq.s32.totalorder %s73, 0
    %p576 = por %p574, %p575
    %p577 = scmp.ne.s32.totalorder %s565, %s566
    %p578 = scmp.eq.s32.totalorder %s74, 1
    %p579 = por %p577, %p578
    %p581 = scmp.ne.s32.totalorder %s566, %s580
    %p582 = scmp.eq.s32.totalorder %s74, 0
    %p583 = por %p581, %p582
    %s585 = sadd.s32 %s584, 1
    %p588 = scmp.eq.s32.totalorder %s68, 1
    %p589 = scmp.ne.s32.totalorder %s584, %s586
    %p590 = scmp.eq.s32.totalorder %s68, 0
    %p591 = por %p589, %p590
    %p592 = scmp.ne.s32.totalorder %s584, %s586
    %p593 = scmp.eq.s32.totalorder %s73, 1
    %p594 = por %p592, %p593
    %p595 = scmp.ne.s32.totalorder %s586, %s587
    %p596 = scmp.eq.s32.totalorder %s73, 0
    %p597 = por %p595, %p596
    %p598 = scmp.ne.s32.totalorder %s586, %s587
    %p599 = scmp.eq.s32.totalorder %s74, 1
    %p600 = por %p598, %p599
    %p602 = scmp.ne.s32.totalorder %s587, %s601
    %p603 = scmp.eq.s32.totalorder %s74, 0
    %p604 = por %p602, %p603
    %s606 = sadd.s32 %s605, 1
    %p609 = scmp.eq.s32.totalorder %s68, 1
    %p610 = scmp.ne.s32.totalorder %s605, %s607
    %p611 = scmp.eq.s32.totalorder %s68, 0
    %p612 = por %p610, %p611
    %p613 = scmp.ne.s32.totalorder %s605, %s607
    %p614 = scmp.eq.s32.totalorder %s73, 1
    %p615 = por %p613, %p614
    %p616 = scmp.ne.s32.totalorder %s607, %s608
    %p617 = scmp.eq.s32.totalorder %s73, 0
    %p618 = por %p616, %p617
    %p619 = scmp.ne.s32.totalorder %s607, %s608
    %p620 = scmp.eq.s32.totalorder %s74, 1
    %p621 = por %p619, %p620
    %p623 = scmp.ne.s32.totalorder %s608, %s622
    %p624 = scmp.eq.s32.totalorder %s74, 0
    %p625 = por %p623, %p624
    %s627 = sadd.s32 %s626, 1
    %p630 = scmp.eq.s32.totalorder %s68, 1
    %p631 = scmp.ne.s32.totalorder %s626, %s628
    %p632 = scmp.eq.s32.totalorder %s68, 0
    %p633 = por %p631, %p632
    %p634 = scmp.ne.s32.totalorder %s626, %s628
    %p635 = scmp.eq.s32.totalorder %s73, 1
    %p636 = por %p634, %p635
    %p637 = scmp.ne.s32.totalorder %s628, %s629
    %p638 = scmp.eq.s32.totalorder %s73, 0
    %p639 = por %p637, %p638
    %p640 = scmp.ne.s32.totalorder %s628, %s629
    %p641 = scmp.eq.s32.totalorder %s74, 1
    %p642 = por %p640, %p641
    %p644 = scmp.ne.s32.totalorder %s629, %s643
    %p645 = scmp.eq.s32.totalorder %s74, 0
    %p646 = por %p644, %p645
    %s648 = sadd.s32 %s647, 1
    %p651 = scmp.eq.s32.totalorder %s68, 1
    %p652 = scmp.ne.s32.totalorder %s647, %s649
    %p653 = scmp.eq.s32.totalorder %s68, 0
    %p654 = por %p652, %p653
    %p655 = scmp.ne.s32.totalorder %s647, %s649
    %p656 = scmp.eq.s32.totalorder %s73, 1
    %p657 = por %p655, %p656
    %p658 = scmp.ne.s32.totalorder %s649, %s650
    %p659 = scmp.eq.s32.totalorder %s73, 0
    %p660 = por %p658, %p659
    %p661 = scmp.ne.s32.totalorder %s649, %s650
    %p662 = scmp.eq.s32.totalorder %s74, 1
    %p663 = por %p661, %p662
    %p665 = scmp.ne.s32.totalorder %s650, %s664
    %p666 = scmp.eq.s32.totalorder %s74, 0
    %p667 = por %p665, %p666
    %s669 = sadd.s32 %s668, 1
    %p672 = scmp.eq.s32.totalorder %s68, 1
    %p673 = scmp.ne.s32.totalorder %s668, %s670
    %p674 = scmp.eq.s32.totalorder %s68, 0
    %p675 = por %p673, %p674
    %p676 = scmp.ne.s32.totalorder %s668, %s670
    %p677 = scmp.eq.s32.totalorder %s73, 1
    %p678 = por %p676, %p677
    %p679 = scmp.ne.s32.totalorder %s670, %s671
    %p680 = scmp.eq.s32.totalorder %s73, 0
    %p681 = por %p679, %p680
    %p682 = scmp.ne.s32.totalorder %s670, %s671
    %p683 = scmp.eq.s32.totalorder %s74, 1
    %p684 = por %p682, %p683
    %p686 = scmp.ne.s32.totalorder %s671, %s685
    %p687 = scmp.eq.s32.totalorder %s74, 0
    %p688 = por %p686, %p687
    %s690 = sadd.s32 %s689, 1
    %p693 = scmp.eq.s32.totalorder %s68, 1
    %p694 = scmp.ne.s32.totalorder %s689, %s691
    %p695 = scmp.eq.s32.totalorder %s68, 0
    %p696 = por %p694, %p695
    %p697 = scmp.ne.s32.totalorder %s689, %s691
    %p698 = scmp.eq.s32.totalorder %s73, 1
    %p699 = por %p697, %p698
    %p700 = scmp.ne.s32.totalorder %s691, %s692
    %p701 = scmp.eq.s32.totalorder %s73, 0
    %p702 = por %p700, %p701
    %p703 = scmp.ne.s32.totalorder %s691, %s692
    %p704 = scmp.eq.s32.totalorder %s74, 1
    %p705 = por %p703, %p704
    %p707 = scmp.ne.s32.totalorder %s692, %s706
    %p708 = scmp.eq.s32.totalorder %s74, 0
    %p709 = por %p707, %p708
    %s710 = ssub.s32 %s68, %s75
    %p711 = scmp.eq.s32.totalorder %s710, 0
    %s713 = sadd.s32 %s712, 1
    %s714 = scalar_select %p711, %s712, %s713
    %p717 = pneg %p711
    %p718 = scmp.eq.s32.totalorder %s68, 1
    %p719 = por %p717, %p718
    %p720 = scmp.ne.s32.totalorder %s712, %s715
    %p721 = scmp.eq.s32.totalorder %s68, 0
    %p722 = por %p720, %p721
    %p723 = scmp.ne.s32.totalorder %s712, %s715
    %p724 = scmp.eq.s32.totalorder %s73, 1
    %p725 = por %p723, %p724
    %p726 = scmp.ne.s32.totalorder %s715, %s716
    %p727 = scmp.eq.s32.totalorder %s73, 0
    %p728 = por %p726, %p727
    %p729 = scmp.ne.s32.totalorder %s715, %s716
    %p730 = scmp.eq.s32.totalorder %s74, 1
    %p731 = por %p729, %p730
    %p733 = scmp.ne.s32.totalorder %s716, %s732
    %p734 = scmp.eq.s32.totalorder %s74, 0
    %p735 = por %p733, %p734
    %s736 = ssub.s32 %s68, %s75
    %p737 = scmp.eq.s32.totalorder %s736, 0
    %s739 = sadd.s32 %s738, 1
    %s740 = scalar_select %p737, %s738, %s739
    %p743 = pneg %p737
    %p744 = scmp.eq.s32.totalorder %s68, 1
    %p745 = por %p743, %p744
    %p746 = scmp.ne.s32.totalorder %s738, %s741
    %p747 = scmp.eq.s32.totalorder %s68, 0
    %p748 = por %p746, %p747
    %p749 = scmp.ne.s32.totalorder %s738, %s741
    %p750 = scmp.eq.s32.totalorder %s73, 1
    %p751 = por %p749, %p750
    %p752 = scmp.ne.s32.totalorder %s741, %s742
    %p753 = scmp.eq.s32.totalorder %s73, 0
    %p754 = por %p752, %p753
    %p755 = scmp.ne.s32.totalorder %s741, %s742
    %p756 = scmp.eq.s32.totalorder %s74, 1
    %p757 = por %p755, %p756
    %p759 = scmp.ne.s32.totalorder %s742, %s758
    %p760 = scmp.eq.s32.totalorder %s74, 0
    %p761 = por %p759, %p760
    %p762 = scmp.le.s32.totalorder 1, %s68
    %p763 = scmp.lt.s32.totalorder %s68, 3
    %p764 = pnand %p762, %p763
    %p765 = pneg %p764
    // Predicated region
    $region9: #{catcon_forward.1} parent=5 // pred_check
      _
    $region10: #{catcon_forward.1} parent=5 // pred_check_branch
      %767 = sbr.rel (%p764) target = $region12
    $region11: #{catcon_forward.1} parent=5 // pred_region
      %s768 = ssub.s32 %s68, 1
      // Predicated region
      $region13: #{catcon_forward.1} parent=11 // pred_check
        %p769 = pneg %p219
      $region14: #{catcon_forward.1} parent=11 // pred_check_branch
        %771 = sbr.rel (%p769) target = $region16
      $region15: #{catcon_forward.1} parent=11 // pred_region
        _
      $region16: #{catcon_forward.1} parent=11 // pred_fallthru
        _
      // Predicated region
      $region17: #{catcon_forward.1} parent=11 // pred_check
        %p772 = pneg %p240
      $region18: #{catcon_forward.1} parent=11 // pred_check_branch
        %774 = sbr.rel (%p772) target = $region20
      $region19: #{catcon_forward.1} parent=11 // pred_region
        _
      $region20: #{catcon_forward.1} parent=11 // pred_fallthru
        _
      // Predicated region
      $region21: #{catcon_forward.1} parent=11 // pred_check
        %p775 = pneg %p261
      $region22: #{catcon_forward.1} parent=11 // pred_check_branch
        %777 = sbr.rel (%p775) target = $region24
      $region23: #{catcon_forward.1} parent=11 // pred_region
        _
      $region24: #{catcon_forward.1} parent=11 // pred_fallthru
        _
      // Predicated region
      $region25: #{catcon_forward.1} parent=11 // pred_check
        %p778 = pneg %p282
      $region26: #{catcon_forward.1} parent=11 // pred_check_branch
        %780 = sbr.rel (%p778) target = $region28
      $region27: #{catcon_forward.1} parent=11 // pred_region
        _
      $region28: #{catcon_forward.1} parent=11 // pred_fallthru
        _
      // Predicated region
      $region29: #{catcon_forward.1} parent=11 // pred_check
        %p781 = pneg %p303
      $region30: #{catcon_forward.1} parent=11 // pred_check_branch
        %783 = sbr.rel (%p781) target = $region32
      $region31: #{catcon_forward.1} parent=11 // pred_region
        _
      $region32: #{catcon_forward.1} parent=11 // pred_fallthru
        _
      // Predicated region
      $region33: #{catcon_forward.1} parent=11 // pred_check
        %p784 = pneg %p324
      $region34: #{catcon_forward.1} parent=11 // pred_check_branch
        %786 = sbr.rel (%p784) target = $region36
      $region35: #{catcon_forward.1} parent=11 // pred_region
        _
      $region36: #{catcon_forward.1} parent=11 // pred_fallthru
        _
      // Predicated region
      $region37: #{catcon_forward.1} parent=11 // pred_check
        %p787 = pneg %p345
      $region38: #{catcon_forward.1} parent=11 // pred_check_branch
        %789 = sbr.rel (%p787) target = $region40
      $region39: #{catcon_forward.1} parent=11 // pred_region
        _
      $region40: #{catcon_forward.1} parent=11 // pred_fallthru
        _
      // Predicated region
      $region41: #{catcon_forward.1} parent=11 // pred_check
        %p790 = pneg %p366
      $region42: #{catcon_forward.1} parent=11 // pred_check_branch
        %792 = sbr.rel (%p790) target = $region44
      $region43: #{catcon_forward.1} parent=11 // pred_region
        _
      $region44: #{catcon_forward.1} parent=11 // pred_fallthru
        _
      // Predicated region
      $region45: #{catcon_forward.1} parent=11 // pred_check
        %p793 = pneg %p387
      $region46: #{catcon_forward.1} parent=11 // pred_check_branch
        %795 = sbr.rel (%p793) target = $region48
      $region47: #{catcon_forward.1} parent=11 // pred_region
        _
      $region48: #{catcon_forward.1} parent=11 // pred_fallthru
        _
      // Predicated region
      $region49: #{catcon_forward.1} parent=11 // pred_check
        %p796 = pneg %p408
      $region50: #{catcon_forward.1} parent=11 // pred_check_branch
        %798 = sbr.rel (%p796) target = $region52
      $region51: #{catcon_forward.1} parent=11 // pred_region
        _
      $region52: #{catcon_forward.1} parent=11 // pred_fallthru
        _
      // Predicated region
      $region53: #{catcon_forward.1} parent=11 // pred_check
        %p799 = pneg %p429
      $region54: #{catcon_forward.1} parent=11 // pred_check_branch
        %801 = sbr.rel (%p799) target = $region56
      $region55: #{catcon_forward.1} parent=11 // pred_region
        _
      $region56: #{catcon_forward.1} parent=11 // pred_fallthru
        _
      // Predicated region
      $region57: #{catcon_forward.1} parent=11 // pred_check
        %p802 = pneg %p450
      $region58: #{catcon_forward.1} parent=11 // pred_check_branch
        %804 = sbr.rel (%p802) target = $region60
      $region59: #{catcon_forward.1} parent=11 // pred_region
        _
      $region60: #{catcon_forward.1} parent=11 // pred_fallthru
        _
      // Predicated region
      $region61: #{catcon_forward.1} parent=11 // pred_check
        %p805 = pneg %p471
      $region62: #{catcon_forward.1} parent=11 // pred_check_branch
        %807 = sbr.rel (%p805) target = $region64
      $region63: #{catcon_forward.1} parent=11 // pred_region
        _
      $region64: #{catcon_forward.1} parent=11 // pred_fallthru
        _
      // Predicated region
      $region65: #{catcon_forward.1} parent=11 // pred_check
        %p808 = pneg %p492
      $region66: #{catcon_forward.1} parent=11 // pred_check_branch
        %810 = sbr.rel (%p808) target = $region68
      $region67: #{catcon_forward.1} parent=11 // pred_region
        _
      $region68: #{catcon_forward.1} parent=11 // pred_fallthru
        _
      // Predicated region
      $region69: #{catcon_forward.1} parent=11 // pred_check
        %p811 = pneg %p513
      $region70: #{catcon_forward.1} parent=11 // pred_check_branch
        %813 = sbr.rel (%p811) target = $region72
      $region71: #{catcon_forward.1} parent=11 // pred_region
        _
      $region72: #{catcon_forward.1} parent=11 // pred_fallthru
        _
      // Predicated region
      $region73: #{catcon_forward.1} parent=11 // pred_check
        %p814 = pneg %p534
      $region74: #{catcon_forward.1} parent=11 // pred_check_branch
        %816 = sbr.rel (%p814) target = $region76
      $region75: #{catcon_forward.1} parent=11 // pred_region
        _
      $region76: #{catcon_forward.1} parent=11 // pred_fallthru
        _
      // Predicated region
      $region77: #{catcon_forward.1} parent=11 // pred_check
        %p817 = pneg %p555
      $region78: #{catcon_forward.1} parent=11 // pred_check_branch
        %819 = sbr.rel (%p817) target = $region80
      $region79: #{catcon_forward.1} parent=11 // pred_region
        _
      $region80: #{catcon_forward.1} parent=11 // pred_fallthru
        _
      // Predicated region
      $region81: #{catcon_forward.1} parent=11 // pred_check
        %p820 = pneg %p576
      $region82: #{catcon_forward.1} parent=11 // pred_check_branch
        %822 = sbr.rel (%p820) target = $region84
      $region83: #{catcon_forward.1} parent=11 // pred_region
        _
      $region84: #{catcon_forward.1} parent=11 // pred_fallthru
        _
      // Predicated region
      $region85: #{catcon_forward.1} parent=11 // pred_check
        %p823 = pneg %p597
      $region86: #{catcon_forward.1} parent=11 // pred_check_branch
        %825 = sbr.rel (%p823) target = $region88
      $region87: #{catcon_forward.1} parent=11 // pred_region
        _
      $region88: #{catcon_forward.1} parent=11 // pred_fallthru
        _
      // Predicated region
      $region89: #{catcon_forward.1} parent=11 // pred_check
        %p826 = pneg %p618
      $region90: #{catcon_forward.1} parent=11 // pred_check_branch
        %828 = sbr.rel (%p826) target = $region92
      $region91: #{catcon_forward.1} parent=11 // pred_region
        _
      $region92: #{catcon_forward.1} parent=11 // pred_fallthru
        _
      // Predicated region
      $region93: #{catcon_forward.1} parent=11 // pred_check
        %p829 = pneg %p639
      $region94: #{catcon_forward.1} parent=11 // pred_check_branch
        %831 = sbr.rel (%p829) target = $region96
      $region95: #{catcon_forward.1} parent=11 // pred_region
        _
      $region96: #{catcon_forward.1} parent=11 // pred_fallthru
        _
      // Predicated region
      $region97: #{catcon_forward.1} parent=11 // pred_check
        %p832 = pneg %p660
      $region98: #{catcon_forward.1} parent=11 // pred_check_branch
        %834 = sbr.rel (%p832) target = $region100
      $region99: #{catcon_forward.1} parent=11 // pred_region
        _
      $region100: #{catcon_forward.1} parent=11 // pred_fallthru
        _
      // Predicated region
      $region101: #{catcon_forward.1} parent=11 // pred_check
        %p835 = pneg %p681
      $region102: #{catcon_forward.1} parent=11 // pred_check_branch
        %837 = sbr.rel (%p835) target = $region104
      $region103: #{catcon_forward.1} parent=11 // pred_region
        _
      $region104: #{catcon_forward.1} parent=11 // pred_fallthru
        _
      // Predicated region
      $region105: #{catcon_forward.1} parent=11 // pred_check
        %p838 = pneg %p702
      $region106: #{catcon_forward.1} parent=11 // pred_check_branch
        %840 = sbr.rel (%p838) target = $region108
      $region107: #{catcon_forward.1} parent=11 // pred_region
        _
      $region108: #{catcon_forward.1} parent=11 // pred_fallthru
        _
    $region12: #{catcon_forward.1} parent=5 // pred_fallthru
      _
    %p841 = scmp.lt.s32.totalorder %s68, 2
    // Predicated region
    $region109: #{catcon_forward.1} parent=5 // pred_check
      %p842 = pneg %p841
    $region110: #{catcon_forward.1} parent=5 // pred_check_branch
      %844 = sbr.rel (%p842) target = $region112
    $region111: #{catcon_forward.1} parent=5 // pred_region
      // Predicated region
      $region113: #{catcon_forward.1} parent=111 // pred_check
        %p845 = pneg %p88
      $region114: #{catcon_forward.1} parent=111 // pred_check_branch
        %847 = sbr.rel (%p845) target = $region116
      $region115: #{catcon_forward.1} parent=111 // pred_region
        %p848 = scmp.lt.s32.totalorder %s68, 1
        %s849 = scalar_select %p848, %s68, 1
        %s850 = smul.addr %s849, 2
        %s851 = smul.addr %s850, 4
        %s852 = scalar_lea.vmem %s1, %s851
      $region116: #{catcon_forward.1} parent=111 // pred_fallthru
        _
      // Predicated region
      $region117: #{catcon_forward.1} parent=111 // pred_check
        %p853 = pneg %p114
      $region118: #{catcon_forward.1} parent=111 // pred_check_branch
        %855 = sbr.rel (%p853) target = $region120
      $region119: #{catcon_forward.1} parent=111 // pred_region
        %p856 = scmp.lt.s32.totalorder %s68, 1
        %s857 = scalar_select %p856, %s68, 1
        %s858 = smul.addr %s857, 4
        %s859 = scalar_lea.vmem %s3, %s858
      $region120: #{catcon_forward.1} parent=111 // pred_fallthru
        _
      // Predicated region
      $region121: #{catcon_forward.1} parent=111 // pred_check
        %p860 = pneg %p140
      $region122: #{catcon_forward.1} parent=111 // pred_check_branch
        %862 = sbr.rel (%p860) target = $region124
      $region123: #{catcon_forward.1} parent=111 // pred_region
        %p863 = scmp.lt.s32.totalorder %s68, 1
        %s864 = scalar_select %p863, %s68, 1
        %s865 = smul.addr %s864, 4
        %s866 = scalar_lea.vmem %s5, %s865
      $region124: #{catcon_forward.1} parent=111 // pred_fallthru
        _
      // Predicated region
      $region125: #{catcon_forward.1} parent=111 // pred_check
        %p867 = pneg %p166
      $region126: #{catcon_forward.1} parent=111 // pred_check_branch
        %869 = sbr.rel (%p867) target = $region128
      $region127: #{catcon_forward.1} parent=111 // pred_region
        %p870 = scmp.lt.s32.totalorder %s68, 1
        %s871 = scalar_select %p870, %s68, 1
        %s872 = smul.addr %s871, 8
        %s873 = scalar_lea.vmem %s7, %s872
      $region128: #{catcon_forward.1} parent=111 // pred_fallthru
        _
      // Predicated region
      $region129: #{catcon_forward.1} parent=111 // pred_check
        %p874 = pneg %p192
      $region130: #{catcon_forward.1} parent=111 // pred_check_branch
        %876 = sbr.rel (%p874) target = $region132
      $region131: #{catcon_forward.1} parent=111 // pred_region
        %p877 = scmp.lt.s32.totalorder %s68, 1
        %s878 = scalar_select %p877, %s68, 1
        %s879 = scalar_lea.vmem %s9, %s878
      $region132: #{catcon_forward.1} parent=111 // pred_fallthru
        _
    $region112: #{catcon_forward.1} parent=5 // pred_fallthru
      _
    %p880 = scmp.le.s32.totalorder 1, %s68
    %p881 = scmp.lt.s32.totalorder %s68, 3
    %p882 = pnand %p880, %p881
    %p883 = pneg %p882
    // Predicated region
    $region133: #{catcon_forward.1} parent=5 // pred_check
      _
    $region134: #{catcon_forward.1} parent=5 // pred_check_branch
      %885 = sbr.rel (%p882) target = $region136
    $region135: #{catcon_forward.1} parent=5 // pred_region
      %s886 = ssub.s32 %s68, 1
      %p887 = scmp.lt.s32.totalorder %s73, 1
      %s888 = scalar_select %p887, %s73, 1
      %s889 = smul.addr %s888, 2
      %s890 = smul.addr %s889, 4
      %s891 = scalar_lea.vmem %s1, %s890
      %p892 = pneg %p94
      %p893 = pneg %p91
      %p894 = scmp.lt.s32.totalorder %s73, 1
      %s895 = scalar_select %p894, %s73, 1
      %s896 = smul.addr %s895, 4
      %s897 = scalar_lea.vmem %s3, %s896
      %p898 = pneg %p120
      %p899 = pneg %p117
      %p900 = scmp.lt.s32.totalorder %s73, 1
      %s901 = scalar_select %p900, %s73, 1
      %s902 = smul.addr %s901, 4
      %s903 = scalar_lea.vmem %s5, %s902
      %p904 = pneg %p146
      %p905 = pneg %p143
      %p906 = scmp.lt.s32.totalorder %s73, 1
      %s907 = scalar_select %p906, %s73, 1
      %s908 = smul.addr %s907, 8
      %s909 = scalar_lea.vmem %s7, %s908
      %p910 = pneg %p172
      %p911 = pneg %p169
      %p912 = scmp.lt.s32.totalorder %s73, 1
      %s913 = scalar_select %p912, %s73, 1
      %s914 = scalar_lea.vmem %s9, %s913
      %p915 = pneg %p198
      %p916 = pneg %p195
      %p917 = pneg %p219
      %p918 = pneg %p216
      %p919 = pneg %p240
      %p920 = pneg %p237
      %p921 = pneg %p261
      %p922 = pneg %p258
      %p923 = pneg %p282
      %p924 = pneg %p279
      %p925 = pneg %p303
      %p926 = pneg %p300
      %p927 = pneg %p324
      %p928 = pneg %p321
      %p929 = pneg %p345
      %p930 = pneg %p342
      %p931 = pneg %p366
      %p932 = pneg %p363
      %p933 = pneg %p387
      %p934 = pneg %p384
      %p935 = pneg %p408
      %p936 = pneg %p405
      %p937 = pneg %p429
      %p938 = pneg %p426
      %p939 = pneg %p450
      %p940 = pneg %p447
      %p941 = pneg %p471
      %p942 = pneg %p468
      %p943 = pneg %p492
      %p944 = pneg %p489
      %p945 = pneg %p513
      %p946 = pneg %p510
      %p947 = pneg %p534
      %p948 = pneg %p531
      %p949 = pneg %p555
      %p950 = pneg %p552
      %p951 = pneg %p576
      %p952 = pneg %p573
      %p953 = pneg %p597
      %p954 = pneg %p594
      %p955 = pneg %p618
      %p956 = pneg %p615
      %p957 = pneg %p639
      %p958 = pneg %p636
      %p959 = pneg %p660
      %p960 = pneg %p657
      %p961 = pneg %p681
      %p962 = pneg %p678
      %p963 = pneg %p702
      %p964 = pneg %p699
      %p965 = pneg %p728
      %p966 = pneg %p725
      %p967 = scmp.lt.s32.totalorder %s73, 1
      %s968 = scalar_select %p967, %s73, 1
      %s969 = smul.addr %s968, 8
      %s970 = scalar_lea.vmem %s59, %s969
      %p971 = pneg %p754
      %p972 = pneg %p751
      %p973 = scmp.lt.s32.totalorder %s73, 1
      %s974 = scalar_select %p973, %s73, 1
      %s975 = smul.addr %s974, 2
      %s976 = smul.addr %s975, 8
      %s977 = scalar_lea.vmem %s61, %s976
      %p978 = scmp.lt.s32.totalorder %s73, 1
      %s979 = scalar_select %p978, %s73, 1
      %s980 = smul.addr %s979, 2
      %s981 = smul.addr %s980, 4
      %s982 = scalar_lea.vmem %s1, %s981
      %p983 = scmp.lt.s32.totalorder %s73, 1
      %s984 = scalar_select %p983, %s73, 1
      %s985 = smul.addr %s984, 4
      %s986 = scalar_lea.vmem %s3, %s985
      %p987 = scmp.lt.s32.totalorder %s73, 1
      %s988 = scalar_select %p987, %s73, 1
      %s989 = smul.addr %s988, 4
      %s990 = scalar_lea.vmem %s5, %s989
      %p991 = scmp.lt.s32.totalorder %s73, 1
      %s992 = scalar_select %p991, %s73, 1
      %s993 = smul.addr %s992, 8
      %s994 = scalar_lea.vmem %s7, %s993
      %p995 = scmp.lt.s32.totalorder %s73, 1
      %s996 = scalar_select %p995, %s73, 1
      %s997 = scalar_lea.vmem %s9, %s996
      %p998 = scmp.lt.s32.totalorder %s73, 1
      %s999 = scalar_select %p998, %s73, 1
      %s1000 = smul.addr %s999, 8
      %s1001 = scalar_lea.vmem %s59, %s1000
      %p1002 = scmp.lt.s32.totalorder %s73, 1
      %s1003 = scalar_select %p1002, %s73, 1
      %s1004 = smul.addr %s1003, 2
      %s1005 = smul.addr %s1004, 8
      %s1006 = scalar_lea.vmem %s61, %s1005
      %v1008 = vld [vmem:[%s982] sm:$0xff]
      %v1009 = vld [vmem:[%s15] sm:$0xf]
      %v1010 = vld [vmem:[%s15 + $0x4] sm:$0xf]
      %v1011 = vld [vmem:[%s15 + $0x8] sm:$0xf]
      %v1012 = vld [vmem:[%s15 + $0xc] sm:$0xf]
      %v1013 = vld [vmem:[%s15 + $0x10] sm:$0xf]
      %v1014 = vld [vmem:[%s15 + $0x14] sm:$0xf]
      %v1015 = vld [vmem:[%s15 + $0x18] sm:$0xf]
      %v1016 = vld [vmem:[%s15 + $0x1c] sm:$0xf]
      %v1017 = vld [vmem:[%s15 + $0x20] sm:$0xf]
      %v1018 = vld [vmem:[%s15 + $0x24] sm:$0xf]
      %v1019 = vld [vmem:[%s15 + $0x28] sm:$0xf]
      %v1020 = vld [vmem:[%s15 + $0x2c] sm:$0xf]
      %v1021 = vld [vmem:[%s15 + $0x30] sm:$0xf]
      %v1022 = vld [vmem:[%s15 + $0x34] sm:$0xf]
      %v1023 = vld [vmem:[%s15 + $0x38] sm:$0xf]
      %v1024 = vld [vmem:[%s15 + $0x3c] sm:$0xf]
      %v1025 = vld [vmem:[%s15 + $0x40] sm:$0xf]
      %v1026 = vld [vmem:[%s15 + $0x44] sm:$0xf]
      %v1027 = vld [vmem:[%s15 + $0x48] sm:$0xf]
      %v1028 = vld [vmem:[%s15 + $0x4c] sm:$0xf]
      %v1029 = vld [vmem:[%s15 + $0x50] sm:$0xf]
      %v1030 = vld [vmem:[%s15 + $0x54] sm:$0xf]
      %v1031 = vld [vmem:[%s15 + $0x58] sm:$0xf]
      %v1032 = vld [vmem:[%s15 + $0x5c] sm:$0xf]
      %v1033 = vld [vmem:[%s15 + $0x60] sm:$0xf]
      %v1034 = vld [vmem:[%s15 + $0x64] sm:$0xf]
      %v1035 = vld [vmem:[%s15 + $0x68] sm:$0xf]
      %v1036 = vld [vmem:[%s15 + $0x6c] sm:$0xf]
      %v1037 = vld [vmem:[%s15 + $0x70] sm:$0xf]
      %v1038 = vld [vmem:[%s15 + $0x74] sm:$0xf]
      %v1039 = vld [vmem:[%s15 + $0x78] sm:$0xf]
      %v1040 = vld [vmem:[%s15 + $0x7c] sm:$0xf]
      %v1041 = vld [vmem:[%s986] sm:$0xf]
      %v1042 = vld [vmem:[%s17] sm:$0xf]
      %vm1043 = vcmask 64512
      %v1045 = vsel %vm1043, %v1041, 0
      %vm1047 = vcmask 1043456
      %v1049 = vsel %vm1047, %v1042, 0
      %1051 = vmatpush.bf16.msra.mxu0 0
      %1052 = vmatpush.bf16.msra.mxu0 0
      %1053 = vmatpush.bf16.msra.mxu0 0
      %1054 = vmatpush.bf16.msra.mxu0 0
      %1055 = vmatpush.bf16.msra.mxu0 0
      %1056 = vmatpush.bf16.msra.mxu0 0
      %1057 = vmatpush.bf16.msra.mxu0 0
      %1058 = vmatpush.bf16.msra.mxu0 %v1049
      %1059 = vmatmul.bf16.gmra.mxu0 %v1045
      %v1060 = vpop.f32.mrf.mxu0
      %v1061 = vadd.f32 0.0, %v1060
      %v1062 = vpop.f32.mrf.mxu0
      %1063 = vdwg.mxu0
      %v1065 = vunpack.c.l.b16 %v1008
      %v1066 = vunpack.c.h.b16 %v1008
      %v1067 = vpack.c.b16 %v1065, %v1065
      %v1068 = vpack.c.b16 %v1066, %v1066
      %v1103 = vunpack.c.l.b16 %v1009
      %v1104 = vunpack.c.l.b16 %v1010
      %v1105 = vunpack.c.l.b16 %v1011
      %v1106 = vunpack.c.l.b16 %v1012
      %v1107 = vunpack.c.l.b16 %v1013
      %v1108 = vunpack.c.l.b16 %v1014
      %v1109 = vunpack.c.l.b16 %v1015
      %v1110 = vunpack.c.l.b16 %v1016
      %v1111 = vunpack.c.l.b16 %v1017
      %v1112 = vunpack.c.l.b16 %v1018
      %v1113 = vunpack.c.l.b16 %v1019
      %v1114 = vunpack.c.l.b16 %v1020
      %v1115 = vunpack.c.l.b16 %v1021
      %v1116 = vunpack.c.l.b16 %v1022
      %v1117 = vunpack.c.l.b16 %v1023
      %v1118 = vunpack.c.l.b16 %v1024
      %v1119 = vunpack.c.l.b16 %v1025
      %v1120 = vunpack.c.l.b16 %v1026
      %v1121 = vunpack.c.l.b16 %v1027
      %v1122 = vunpack.c.l.b16 %v1028
      %v1123 = vunpack.c.l.b16 %v1029
      %v1124 = vunpack.c.l.b16 %v1030
      %v1125 = vunpack.c.l.b16 %v1031
      %v1126 = vunpack.c.l.b16 %v1032
      %v1127 = vunpack.c.l.b16 %v1033
      %v1128 = vunpack.c.l.b16 %v1034
      %v1129 = vunpack.c.l.b16 %v1035
      %v1130 = vunpack.c.l.b16 %v1036
      %v1131 = vunpack.c.l.b16 %v1037
      %v1132 = vunpack.c.l.b16 %v1038
      %v1133 = vunpack.c.l.b16 %v1039
      %v1134 = vunpack.c.l.b16 %v1040
      %v1135 = vpack.c.b16 %v1104, %v1103
      %v1136 = vpack.c.b16 %v1106, %v1105
      %v1137 = vpack.c.b16 %v1108, %v1107
      %v1138 = vpack.c.b16 %v1110, %v1109
      %v1139 = vpack.c.b16 %v1112, %v1111
      %v1140 = vpack.c.b16 %v1114, %v1113
      %v1141 = vpack.c.b16 %v1116, %v1115
      %v1142 = vpack.c.b16 %v1118, %v1117
      %v1143 = vpack.c.b16 %v1120, %v1119
      %v1144 = vpack.c.b16 %v1122, %v1121
      %v1145 = vpack.c.b16 %v1124, %v1123
      %v1146 = vpack.c.b16 %v1126, %v1125
      %v1147 = vpack.c.b16 %v1128, %v1127
      %v1148 = vpack.c.b16 %v1130, %v1129
      %v1149 = vpack.c.b16 %v1132, %v1131
      %v1150 = vpack.c.b16 %v1134, %v1133
      %1167 = vmatpush.bf16.msra.mxu0 %v1142
      %1168 = vmatpush.bf16.msra.mxu0 %v1141
      %1169 = vmatpush.bf16.msra.mxu0 %v1140
      %1170 = vmatpush.bf16.msra.mxu0 %v1139
      %1171 = vmatpush.bf16.msra.mxu0 %v1138
      %1172 = vmatpush.bf16.msra.mxu0 %v1137
      %1173 = vmatpush.bf16.msra.mxu0 %v1136
      %1174 = vmatpush.bf16.msra.mxu0 %v1135
      %1175 = vmatmul.bf16.gmra.mxu0 %v1067
      %v1176 = vpop.f32.mrf.mxu0
      %v1177 = vadd.f32 %v1061, %v1176
      %v1178 = vpop.f32.mrf.mxu0
      %1179 = vdwg.mxu0
      %1180 = vmatpush.bf16.msra.mxu0 %v1150
      %1181 = vmatpush.bf16.msra.mxu0 %v1149
      %1182 = vmatpush.bf16.msra.mxu0 %v1148
      %1183 = vmatpush.bf16.msra.mxu0 %v1147
      %1184 = vmatpush.bf16.msra.mxu0 %v1146
      %1185 = vmatpush.bf16.msra.mxu0 %v1145
      %1186 = vmatpush.bf16.msra.mxu0 %v1144
      %1187 = vmatpush.bf16.msra.mxu0 %v1143
      %1188 = vmatmul.bf16.gmra.mxu0 %v1068
      %v1189 = vpop.f32.mrf.mxu0
      %v1190 = vadd.f32 %v1177, %v1189
      %v1191 = vpop.f32.mrf.mxu0
      %1192 = vdwg.mxu0
      %v1193 = vld [vmem:[%s19] sm:$0x1]
      %v1195 = vperm.slane %v1193, 0
      %v1197 = vadd.f32 %v1190, %v1195
      %v1198 = vmax.f32 %v1197, 0.0
      %v1199 = vpack.c.bf16 %v1198, %v1198
      %v1200 = vld [vmem:[%s21] sm:$0xf]
      %v1201 = vld [vmem:[%s21 + $0x4] sm:$0xf]
      %v1202 = vld [vmem:[%s21 + $0x8] sm:$0xf]
      %v1203 = vld [vmem:[%s21 + $0xc] sm:$0xf]
      %v1204 = vld [vmem:[%s21 + $0x10] sm:$0xf]
      %v1205 = vld [vmem:[%s21 + $0x14] sm:$0xf]
      %v1206 = vld [vmem:[%s21 + $0x18] sm:$0xf]
      %v1207 = vld [vmem:[%s21 + $0x1c] sm:$0xf]
      %v1208 = vld [vmem:[%s23] sm:$0x1]
      %v1210 = vperm.slane %v1208, 0
      %v1220 = vunpack.c.l.b16 %v1200
      %v1221 = vunpack.c.l.b16 %v1201
      %v1222 = vunpack.c.l.b16 %v1202
      %v1223 = vunpack.c.l.b16 %v1203
      %v1224 = vunpack.c.l.b16 %v1204
      %v1225 = vunpack.c.l.b16 %v1205
      %v1226 = vunpack.c.l.b16 %v1206
      %v1227 = vunpack.c.l.b16 %v1207
      %v1228 = vpack.c.b16 %v1221, %v1220
      %v1229 = vpack.c.b16 %v1223, %v1222
      %v1230 = vpack.c.b16 %v1225, %v1224
      %v1231 = vpack.c.b16 %v1227, %v1226
      %vm1236 = vcmask 523264
      %v1238 = vsel %vm1236, %v1199, 0
      %1240 = vmatpush.bf16.msra.mxu0 0
      %1241 = vmatpush.bf16.msra.mxu0 0
      %1242 = vmatpush.bf16.msra.mxu0 0
      %1243 = vmatpush.bf16.msra.mxu0 0
      %1244 = vmatpush.bf16.msra.mxu0 %v1231
      %1245 = vmatpush.bf16.msra.mxu0 %v1230
      %1246 = vmatpush.bf16.msra.mxu0 %v1229
      %1247 = vmatpush.bf16.msra.mxu0 %v1228
      %1248 = vmatmul.bf16.gmra.mxu0 %v1238
      %v1249 = vpop.f32.mrf.mxu0
      %v1250 = vadd.f32 %v1210, %v1249
      %v1251 = vpop.f32.mrf.mxu0
      %1252 = vdwg.mxu0
      %1253 = vst [vmem:[%s1001] sm:$0xff] %v1250
      %v1254 = vmul.f32 %v1250, 0.5
      %v1255 = vmul.f32 %v1254, 1.442695
      %v1256 = vpow.pop %v1255
      %v1257 = vld [vmem:[%s994] sm:$0xff]
      %1259 = vrot.lane.b32.xlu0 %v1257, 32
      %v1260 = vpop.permute.xlu0 %1259
      %v1262 = vmul.f32 %v1256, %v1260
      %1264 = vrot.lane.b32.xlu0 %v1262, 96
      %v1265 = vpop.permute.xlu0 %1264
      %v1267 = vadd.f32 %v1250, %v1265
      %v1268 = vld [vmem:[%s990] sm:$0xf]
      %v1269 = vld [vmem:[%s25] sm:$0xf]
      %v1270 = vld [vmem:[%s25 + $0x4] sm:$0xf]
      %v1271 = vld [vmem:[%s25 + $0x8] sm:$0xf]
      %v1272 = vld [vmem:[%s27] sm:$0x1]
      %v1274 = vperm.slane %v1272, 0
      %v1279 = vunpack.c.l.b16 %v1269
      %v1280 = vunpack.c.l.b16 %v1270
      %v1281 = vunpack.c.l.b16 %v1271
      %v1282 = vpack.c.b16 %v1280, %v1279
      %v1283 = vpack.c.b16 %v1281, %v1281
      %vm1285 = vcmask 195584
      %v1287 = vsel %vm1285, %v1268, 0
      %v1290 = vsel %vm1047, %v1283, 0
      %1292 = vmatpush.bf16.msra.mxu0 0
      %1293 = vmatpush.bf16.msra.mxu0 0
      %1294 = vmatpush.bf16.msra.mxu0 0
      %1295 = vmatpush.bf16.msra.mxu0 0
      %1296 = vmatpush.bf16.msra.mxu0 0
      %1297 = vmatpush.bf16.msra.mxu0 0
      %1298 = vmatpush.bf16.msra.mxu0 %v1290
      %1299 = vmatpush.bf16.msra.mxu0 %v1282
      %1300 = vmatmul.bf16.gmra.mxu0 %v1287
      %v1301 = vpop.f32.mrf.mxu0
      %v1302 = vadd.f32 %v1274, %v1301
      %v1303 = vpop.f32.mrf.mxu0
      %1304 = vdwg.mxu0
      %v1305 = vpack.c.bf16 %v1267, %v1267
      %v1306 = vld [vmem:[%s29] sm:$0xf]
      %v1307 = vld [vmem:[%s29 + $0x4] sm:$0xf]
      %v1308 = vld [vmem:[%s29 + $0x8] sm:$0xf]
      %v1309 = vld [vmem:[%s29 + $0xc] sm:$0xf]
      %v1310 = vld [vmem:[%s31] sm:$0x1]
      %v1312 = vperm.slane %v1310, 0
      %v1318 = vunpack.c.l.b16 %v1306
      %v1319 = vunpack.c.l.b16 %v1307
      %v1320 = vunpack.c.l.b16 %v1308
      %v1321 = vunpack.c.l.b16 %v1309
      %v1322 = vpack.c.b16 %v1319, %v1318
      %v1323 = vpack.c.b16 %v1321, %v1320
      %vm1326 = vcmask 261120
      %v1328 = vsel %vm1326, %v1305, 0
      %1330 = vmatpush.bf16.msra.mxu0 0
      %1331 = vmatpush.bf16.msra.mxu0 0
      %1332 = vmatpush.bf16.msra.mxu0 0
      %1333 = vmatpush.bf16.msra.mxu0 0
      %1334 = vmatpush.bf16.msra.mxu0 0
      %1335 = vmatpush.bf16.msra.mxu0 0
      %1336 = vmatpush.bf16.msra.mxu0 %v1323
      %1337 = vmatpush.bf16.msra.mxu0 %v1322
      %1338 = vmatmul.bf16.gmra.mxu0 %v1328
      %v1339 = vpop.f32.mrf.mxu0
      %v1340 = vadd.f32 %v1312, %v1339
      %v1341 = vpop.f32.mrf.mxu0
      %1342 = vdwg.mxu0
      %v1343 = vld [vmem:[%s11] sm:$0xf]
      %v1344 = vld [vmem:[%s997] sm:$0x1]
      %v1345 = vpack.c.bf16 %v1302, %v1302
      %vm1346 = vcmask 97280
      %v1348 = vsel %vm1346, %v1343, 0
      %v1351 = vsel %vm1346, %v1345, 0
      %1353 = vmatpush.bf16.xpose.msra.mxu0 0
      %1354 = vmatpush.bf16.xpose.msra.mxu0 0
      %1355 = vmatpush.bf16.xpose.msra.mxu0 0
      %1356 = vmatpush.bf16.xpose.msra.mxu0 0
      %1357 = vmatpush.bf16.xpose.msra.mxu0 0
      %1358 = vmatpush.bf16.xpose.msra.mxu0 0
      %1359 = vmatpush.bf16.xpose.msra.mxu0 0
      %1360 = vmatpush.bf16.xpose.msra.mxu0 %v1351
      %1361 = vmatmul.bf16.gmra.mxu0 %v1348
      %v1362 = vpop.f32.mrf.mxu0
      %v1363 = vadd.f32 0.0, %v1362
      %v1364 = vpop.f32.mrf.mxu0
      %1365 = vdwg.mxu0
      %v1366 = vmul.f32 %v1363, 0.28867513
      %v1368 = vperm.slane %v1344, 0
      %v1370 = vadd.f32 %v1366, %v1368
      %v1371 = vsel %vm1043, %v1370, -inf
      %1372 = vmax.xlane.f32.xlu0 %v1371
      %v1373 = vpop.xlane.xlu0 %1372
      %v1374 = vsub.f32 %v1370, %v1373
      %v1375 = vmul.f32 %v1374, 1.442695
      %v1376 = vpow.pop %v1375
      %v1377 = vsel %vm1043, %v1376, 0.0
      %1378 = vadd.xlane.f32.xlu0 %v1377
      %v1379 = vpop.xlane.xlu0 %1378
      %v1380 = vrcp.pop %v1379
      %v1381 = vmul.f32 %v1376, %v1380
      %v1382 = vpack.c.bf16 %v1340, %v1340
      %v1383 = vpack.c.bf16 %v1381, %v1381
      %v1385 = vsel %vm1043, %v1383, 0
      %v1388 = vsel %vm1047, %v1382, 0
      %1390 = vmatpush.bf16.msra.mxu0 0
      %1391 = vmatpush.bf16.msra.mxu0 0
      %1392 = vmatpush.bf16.msra.mxu0 0
      %1393 = vmatpush.bf16.msra.mxu0 0
      %1394 = vmatpush.bf16.msra.mxu0 0
      %1395 = vmatpush.bf16.msra.mxu0 0
      %1396 = vmatpush.bf16.msra.mxu0 0
      %1397 = vmatpush.bf16.msra.mxu0 %v1388
      %1398 = vmatmul.bf16.gmra.mxu0 %v1385
      %v1399 = vpop.f32.mrf.mxu0
      %v1400 = vadd.f32 0.0, %v1399
      %v1401 = vpop.f32.mrf.mxu0
      %1402 = vdwg.mxu0
      %v1404 = vunpack.c.l.b16 %v1343
      %v1405 = vpack.c.b16 %v1404, %v1404
      %1406 = vrot.lane.b32.xlu0 %v1405, 116
      %v1407 = vpop.permute.xlu0 %1406
      %1409 = vrot.lane.b32.xlu0 %v1345, 116
      %v1410 = vpop.permute.xlu0 %1409
      %v1412 = vsel %vm1346, %v1407, 0
      %v1415 = vsel %vm1346, %v1410, 0
      %1417 = vmatpush.bf16.xpose.msra.mxu0 0
      %1418 = vmatpush.bf16.xpose.msra.mxu0 0
      %1419 = vmatpush.bf16.xpose.msra.mxu0 0
      %1420 = vmatpush.bf16.xpose.msra.mxu0 0
      %1421 = vmatpush.bf16.xpose.msra.mxu0 0
      %1422 = vmatpush.bf16.xpose.msra.mxu0 0
      %1423 = vmatpush.bf16.xpose.msra.mxu0 0
      %1424 = vmatpush.bf16.xpose.msra.mxu0 %v1415
      %1425 = vmatmul.bf16.gmra.mxu0 %v1412
      %v1426 = vpop.f32.mrf.mxu0
      %v1427 = vadd.f32 0.0, %v1426
      %v1428 = vpop.f32.mrf.mxu0
      %1429 = vdwg.mxu0
      %v1430 = vmul.f32 %v1427, 0.28867513
      %v1431 = vadd.f32 %v1430, %v1368
      %v1432 = vsel %vm1043, %v1431, -inf
      %1433 = vmax.xlane.f32.xlu0 %v1432
      %v1434 = vpop.xlane.xlu0 %1433
      %v1435 = vsub.f32 %v1431, %v1434
      %v1436 = vmul.f32 %v1435, 1.442695
      %v1437 = vpow.pop %v1436
      %v1438 = vsel %vm1043, %v1437, 0.0
      %1439 = vadd.xlane.f32.xlu0 %v1438
      %v1440 = vpop.xlane.xlu0 %1439
      %v1441 = vrcp.pop %v1440
      %v1442 = vmul.f32 %v1437, %v1441
      %v1443 = vpack.c.bf16 %v1442, %v1442
      %1445 = vrot.lane.b32.xlu0 %v1382, 112
      %v1446 = vpop.permute.xlu0 %1445
      %v1448 = vsel %vm1043, %v1443, 0
      %v1451 = vsel %vm1047, %v1446, 0
      %1453 = vmatpush.bf16.msra.mxu0 0
      %1454 = vmatpush.bf16.msra.mxu0 0
      %1455 = vmatpush.bf16.msra.mxu0 0
      %1456 = vmatpush.bf16.msra.mxu0 0
      %1457 = vmatpush.bf16.msra.mxu0 0
      %1458 = vmatpush.bf16.msra.mxu0 0
      %1459 = vmatpush.bf16.msra.mxu0 0
      %1460 = vmatpush.bf16.msra.mxu0 %v1451
      %1461 = vmatmul.bf16.gmra.mxu0 %v1448
      %v1462 = vpop.f32.mrf.mxu0
      %v1463 = vadd.f32 0.0, %v1462
      %v1464 = vpop.f32.mrf.mxu0
      %1465 = vdwg.mxu0
      %1467 = vrot.lane.b32.xlu0 %v1463, 16
      %v1468 = vpop.permute.xlu0 %1467
      %vm1470 = vcmask 130048
      %v1471 = vsel %vm1470, %v1400, %v1468
      %v1472 = vpack.c.bf16 %v1471, %v1471
      %v1473 = vld [vmem:[%s33] sm:$0xf]
      %v1474 = vld [vmem:[%s33 + $0x4] sm:$0xf]
      %v1475 = vld [vmem:[%s33 + $0x8] sm:$0xf]
      %v1476 = vld [vmem:[%s33 + $0xc] sm:$0xf]
      %v1477 = vld [vmem:[%s35] sm:$0x1]
      %v1479 = vperm.slane %v1477, 0
      %v1485 = vunpack.c.l.b16 %v1473
      %v1486 = vunpack.c.l.b16 %v1474
      %v1487 = vunpack.c.l.b16 %v1475
      %v1488 = vunpack.c.l.b16 %v1476
      %v1489 = vpack.c.b16 %v1486, %v1485
      %v1490 = vpack.c.b16 %v1488, %v1487
      %v1494 = vsel %vm1326, %v1472, 0
      %1496 = vmatpush.bf16.msra.mxu0 0
      %1497 = vmatpush.bf16.msra.mxu0 0
      %1498 = vmatpush.bf16.msra.mxu0 0
      %1499 = vmatpush.bf16.msra.mxu0 0
      %1500 = vmatpush.bf16.msra.mxu0 0
      %1501 = vmatpush.bf16.msra.mxu0 0
      %1502 = vmatpush.bf16.msra.mxu0 %v1490
      %1503 = vmatpush.bf16.msra.mxu0 %v1489
      %1504 = vmatmul.bf16.gmra.mxu0 %v1494
      %v1505 = vpop.f32.mrf.mxu0
      %v1506 = vadd.f32 %v1479, %v1505
      %v1507 = vpop.f32.mrf.mxu0
      %1508 = vdwg.mxu0
      %v1509 = vld [vmem:[%s37] sm:$0xf]
      %v1510 = vld [vmem:[%s37 + $0x4] sm:$0xf]
      %v1511 = vld [vmem:[%s37 + $0x8] sm:$0xf]
      %v1512 = vld [vmem:[%s39] sm:$0x1]
      %v1514 = vperm.slane %v1512, 0
      %v1519 = vunpack.c.l.b16 %v1509
      %v1520 = vunpack.c.l.b16 %v1510
      %v1521 = vunpack.c.l.b16 %v1511
      %v1522 = vpack.c.b16 %v1520, %v1519
      %v1523 = vpack.c.b16 %v1521, %v1521
      %v1526 = vsel %vm1047, %v1523, 0
      %1528 = vmatpush.bf16.msra.mxu0 0
      %1529 = vmatpush.bf16.msra.mxu0 0
      %1530 = vmatpush.bf16.msra.mxu0 0
      %1531 = vmatpush.bf16.msra.mxu0 0
      %1532 = vmatpush.bf16.msra.mxu0 0
      %1533 = vmatpush.bf16.msra.mxu0 0
      %1534 = vmatpush.bf16.msra.mxu0 %v1526
      %1535 = vmatpush.bf16.msra.mxu0 %v1522
      %1536 = vmatmul.bf16.gmra.mxu0 %v1287
      %v1537 = vpop.f32.mrf.mxu0
      %v1538 = vadd.f32 %v1514, %v1537
      %v1539 = vpop.f32.mrf.mxu0
      %1540 = vdwg.mxu0
      %v1541 = vpack.c.bf16 %v1506, %v1506
      %v1542 = vld [vmem:[%s41] sm:$0xf]
      %v1543 = vld [vmem:[%s41 + $0x4] sm:$0xf]
      %v1544 = vld [vmem:[%s41 + $0x8] sm:$0xf]
      %v1545 = vld [vmem:[%s41 + $0xc] sm:$0xf]
      %v1546 = vld [vmem:[%s43] sm:$0x1]
      %v1548 = vperm.slane %v1546, 0
      %v1554 = vunpack.c.l.b16 %v1542
      %v1555 = vunpack.c.l.b16 %v1543
      %v1556 = vunpack.c.l.b16 %v1544
      %v1557 = vunpack.c.l.b16 %v1545
      %v1558 = vpack.c.b16 %v1555, %v1554
      %v1559 = vpack.c.b16 %v1557, %v1556
      %v1563 = vsel %vm1326, %v1541, 0
      %1565 = vmatpush.bf16.msra.mxu0 0
      %1566 = vmatpush.bf16.msra.mxu0 0
      %1567 = vmatpush.bf16.msra.mxu0 0
      %1568 = vmatpush.bf16.msra.mxu0 0
      %1569 = vmatpush.bf16.msra.mxu0 0
      %1570 = vmatpush.bf16.msra.mxu0 0
      %1571 = vmatpush.bf16.msra.mxu0 %v1559
      %1572 = vmatpush.bf16.msra.mxu0 %v1558
      %1573 = vmatmul.bf16.gmra.mxu0 %v1563
      %v1574 = vpop.f32.mrf.mxu0
      %v1575 = vadd.f32 %v1548, %v1574
      %v1576 = vpop.f32.mrf.mxu0
      %1577 = vdwg.mxu0
      %v1578 = vld [vmem:[%s13] sm:$0xf]
      %v1579 = vpack.c.bf16 %v1538, %v1538
      %v1581 = vsel %vm1346, %v1579, 0
      %v1584 = vsel %vm1346, %v1578, 0
      %1586 = vmatpush.bf16.xpose.msra.mxu0 0
      %1587 = vmatpush.bf16.xpose.msra.mxu0 0
      %1588 = vmatpush.bf16.xpose.msra.mxu0 0
      %1589 = vmatpush.bf16.xpose.msra.mxu0 0
      %1590 = vmatpush.bf16.xpose.msra.mxu0 0
      %1591 = vmatpush.bf16.xpose.msra.mxu0 0
      %1592 = vmatpush.bf16.xpose.msra.mxu0 0
      %1593 = vmatpush.bf16.xpose.msra.mxu0 %v1584
      %1594 = vmatmul.bf16.gmra.mxu0 %v1581
      %v1595 = vpop.f32.mrf.mxu0
      %v1596 = vadd.f32 0.0, %v1595
      %v1597 = vpop.f32.mrf.mxu0
      %1598 = vdwg.mxu0
      %v1599 = vmul.f32 %v1596, 0.28867513
      %v1600 = vsel %vm1043, %v1599, -inf
      %1601 = vmax.xlane.f32.xlu0 %v1600
      %v1602 = vpop.xlane.xlu0 %1601
      %v1603 = vsub.f32 %v1599, %v1602
      %v1604 = vmul.f32 %v1603, 1.442695
      %v1605 = vpow.pop %v1604
      %v1606 = vsel %vm1043, %v1605, 0.0
      %1607 = vadd.xlane.f32.xlu0 %v1606
      %v1608 = vpop.xlane.xlu0 %1607
      %v1609 = vrcp.pop %v1608
      %v1610 = vmul.f32 %v1605, %v1609
      %v1611 = vpack.c.bf16 %v1575, %v1575
      %v1612 = vpack.c.bf16 %v1610, %v1610
      %v1614 = vsel %vm1043, %v1612, 0
      %v1617 = vsel %vm1047, %v1611, 0
      %1619 = vmatpush.bf16.msra.mxu0 0
      %1620 = vmatpush.bf16.msra.mxu0 0
      %1621 = vmatpush.bf16.msra.mxu0 0
      %1622 = vmatpush.bf16.msra.mxu0 0
      %1623 = vmatpush.bf16.msra.mxu0 0
      %1624 = vmatpush.bf16.msra.mxu0 0
      %1625 = vmatpush.bf16.msra.mxu0 0
      %1626 = vmatpush.bf16.msra.mxu0 %v1617
      %1627 = vmatmul.bf16.gmra.mxu0 %v1614
      %v1628 = vpop.f32.mrf.mxu0
      %v1629 = vadd.f32 0.0, %v1628
      %v1630 = vpop.f32.mrf.mxu0
      %1631 = vdwg.mxu0
      %1633 = vrot.lane.b32.xlu0 %v1579, 116
      %v1634 = vpop.permute.xlu0 %1633
      %v1636 = vunpack.c.l.b16 %v1578
      %v1637 = vpack.c.b16 %v1636, %v1636
      %1638 = vrot.lane.b32.xlu0 %v1637, 116
      %v1639 = vpop.permute.xlu0 %1638
      %v1641 = vsel %vm1346, %v1634, 0
      %v1644 = vsel %vm1346, %v1639, 0
      %1646 = vmatpush.bf16.xpose.msra.mxu0 0
      %1647 = vmatpush.bf16.xpose.msra.mxu0 0
      %1648 = vmatpush.bf16.xpose.msra.mxu0 0
      %1649 = vmatpush.bf16.xpose.msra.mxu0 0
      %1650 = vmatpush.bf16.xpose.msra.mxu0 0
      %1651 = vmatpush.bf16.xpose.msra.mxu0 0
      %1652 = vmatpush.bf16.xpose.msra.mxu0 0
      %1653 = vmatpush.bf16.xpose.msra.mxu0 %v1644
      %1654 = vmatmul.bf16.gmra.mxu0 %v1641
      %v1655 = vpop.f32.mrf.mxu0
      %v1656 = vadd.f32 0.0, %v1655
      %v1657 = vpop.f32.mrf.mxu0
      %1658 = vdwg.mxu0
      %v1659 = vmul.f32 %v1656, 0.28867513
      %v1660 = vsel %vm1043, %v1659, -inf
      %1661 = vmax.xlane.f32.xlu0 %v1660
      %v1662 = vpop.xlane.xlu0 %1661
      %v1663 = vsub.f32 %v1659, %v1662
      %v1664 = vmul.f32 %v1663, 1.442695
      %v1665 = vpow.pop %v1664
      %v1666 = vsel %vm1043, %v1665, 0.0
      %1667 = vadd.xlane.f32.xlu0 %v1666
      %v1668 = vpop.xlane.xlu0 %1667
      %v1669 = vrcp.pop %v1668
      %v1670 = vmul.f32 %v1665, %v1669
      %v1671 = vpack.c.bf16 %v1670, %v1670
      %1673 = vrot.lane.b32.xlu0 %v1611, 112
      %v1674 = vpop.permute.xlu0 %1673
      %v1676 = vsel %vm1043, %v1671, 0
      %v1679 = vsel %vm1047, %v1674, 0
      %1681 = vmatpush.bf16.msra.mxu0 0
      %1682 = vmatpush.bf16.msra.mxu0 0
      %1683 = vmatpush.bf16.msra.mxu0 0
      %1684 = vmatpush.bf16.msra.mxu0 0
      %1685 = vmatpush.bf16.msra.mxu0 0
      %1686 = vmatpush.bf16.msra.mxu0 0
      %1687 = vmatpush.bf16.msra.mxu0 0
      %1688 = vmatpush.bf16.msra.mxu0 %v1679
      %1689 = vmatmul.bf16.gmra.mxu0 %v1676
      %v1690 = vpop.f32.mrf.mxu0
      %v1691 = vadd.f32 0.0, %v1690
      %v1692 = vpop.f32.mrf.mxu0
      %1693 = vdwg.mxu0
      %1695 = vrot.lane.b32.xlu0 %v1691, 16
      %v1696 = vpop.permute.xlu0 %1695
      %v1698 = vsel %vm1470, %v1629, %v1696
      %v1699 = vpack.c.bf16 %v1698, %v1698
      %v1700 = vld [vmem:[%s45] sm:$0xf]
      %v1701 = vld [vmem:[%s45 + $0x4] sm:$0xf]
      %v1702 = vld [vmem:[%s45 + $0x8] sm:$0xf]
      %v1703 = vld [vmem:[%s45 + $0xc] sm:$0xf]
      %v1704 = vld [vmem:[%s47] sm:$0x1]
      %v1706 = vperm.slane %v1704, 0
      %v1712 = vunpack.c.l.b16 %v1700
      %v1713 = vunpack.c.l.b16 %v1701
      %v1714 = vunpack.c.l.b16 %v1702
      %v1715 = vunpack.c.l.b16 %v1703
      %v1716 = vpack.c.b16 %v1713, %v1712
      %v1717 = vpack.c.b16 %v1715, %v1714
      %v1721 = vsel %vm1326, %v1699, 0
      %1723 = vmatpush.bf16.msra.mxu0 0
      %1724 = vmatpush.bf16.msra.mxu0 0
      %1725 = vmatpush.bf16.msra.mxu0 0
      %1726 = vmatpush.bf16.msra.mxu0 0
      %1727 = vmatpush.bf16.msra.mxu0 0
      %1728 = vmatpush.bf16.msra.mxu0 0
      %1729 = vmatpush.bf16.msra.mxu0 %v1717
      %1730 = vmatpush.bf16.msra.mxu0 %v1716
      %1731 = vmatmul.bf16.gmra.mxu0 %v1721
      %v1732 = vpop.f32.mrf.mxu0
      %v1733 = vadd.f32 %v1706, %v1732
      %v1734 = vpop.f32.mrf.mxu0
      %1735 = vdwg.mxu0
      %v1736 = vadd.f32 %v1733, %v1267
      %v1737 = vpack.c.bf16 %v1736, %v1736
      %v1738 = vld [vmem:[%s49] sm:$0xf]
      %v1739 = vld [vmem:[%s49 + $0x4] sm:$0xf]
      %v1740 = vld [vmem:[%s49 + $0x8] sm:$0xf]
      %v1741 = vld [vmem:[%s49 + $0xc] sm:$0xf]
      %v1742 = vld [vmem:[%s986] sm:$0xf]
      %v1743 = vld [vmem:[%s51] sm:$0xf]
      %v1745 = vsel %vm1043, %v1742, 0
      %v1748 = vsel %vm1047, %v1743, 0
      %1750 = vmatpush.bf16.msra.mxu0 0
      %1751 = vmatpush.bf16.msra.mxu0 0
      %1752 = vmatpush.bf16.msra.mxu0 0
      %1753 = vmatpush.bf16.msra.mxu0 0
      %1754 = vmatpush.bf16.msra.mxu0 0
      %1755 = vmatpush.bf16.msra.mxu0 0
      %1756 = vmatpush.bf16.msra.mxu0 0
      %1757 = vmatpush.bf16.msra.mxu0 %v1748
      %1758 = vmatmul.bf16.gmra.mxu0 %v1745
      %v1759 = vpop.f32.mrf.mxu0
      %v1760 = vadd.f32 0.0, %v1759
      %v1761 = vpop.f32.mrf.mxu0
      %1762 = vdwg.mxu0
      %v1767 = vunpack.c.l.b16 %v1738
      %v1768 = vunpack.c.l.b16 %v1739
      %v1769 = vunpack.c.l.b16 %v1740
      %v1770 = vunpack.c.l.b16 %v1741
      %v1771 = vpack.c.b16 %v1768, %v1767
      %v1772 = vpack.c.b16 %v1770, %v1769
      %v1776 = vsel %vm1326, %v1737, 0
      %1778 = vmatpush.bf16.msra.mxu0 0
      %1779 = vmatpush.bf16.msra.mxu0 0
      %1780 = vmatpush.bf16.msra.mxu0 0
      %1781 = vmatpush.bf16.msra.mxu0 0
      %1782 = vmatpush.bf16.msra.mxu0 0
      %1783 = vmatpush.bf16.msra.mxu0 0
      %1784 = vmatpush.bf16.msra.mxu0 %v1772
      %1785 = vmatpush.bf16.msra.mxu0 %v1771
      %1786 = vmatmul.bf16.gmra.mxu0 %v1776
      %v1787 = vpop.f32.mrf.mxu0
      %v1788 = vadd.f32 %v1760, %v1787
      %v1789 = vpop.f32.mrf.mxu0
      %1790 = vdwg.mxu0
      %v1791 = vld [vmem:[%s53] sm:$0x1]
      %v1793 = vperm.slane %v1791, 0
      %v1795 = vadd.f32 %v1788, %v1793
      %v1796 = vmax.f32 %v1795, 0.0
      %v1797 = vpack.c.bf16 %v1796, %v1796
      %v1798 = vld [vmem:[%s55] sm:$0xff]
      %v1799 = vld [vmem:[%s55 + $0x8] sm:$0xff]
      %v1800 = vld [vmem:[%s55 + $0x10] sm:$0xff]
      %v1801 = vld [vmem:[%s55 + $0x18] sm:$0xff]
      %v1802 = vld [vmem:[%s55 + $0x20] sm:$0xff]
      %v1803 = vld [vmem:[%s55 + $0x28] sm:$0xff]
      %v1804 = vld [vmem:[%s55 + $0x30] sm:$0xff]
      %v1805 = vld [vmem:[%s55 + $0x38] sm:$0xff]
      %v1806 = vld [vmem:[%s57] sm:$0x3]
      %v1808 = vperm.slane %v1806, 0
      %v1809 = vperm.slane %v1806, 1
      %v1820 = vunpack.c.l.b16 %v1798
      %v1821 = vunpack.c.h.b16 %v1798
      %v1822 = vunpack.c.l.b16 %v1799
      %v1823 = vunpack.c.h.b16 %v1799
      %v1824 = vunpack.c.l.b16 %v1800
      %v1825 = vunpack.c.h.b16 %v1800
      %v1826 = vunpack.c.l.b16 %v1801
      %v1827 = vunpack.c.h.b16 %v1801
      %v1828 = vunpack.c.l.b16 %v1802
      %v1829 = vunpack.c.h.b16 %v1802
      %v1830 = vunpack.c.l.b16 %v1803
      %v1831 = vunpack.c.h.b16 %v1803
      %v1832 = vunpack.c.l.b16 %v1804
      %v1833 = vunpack.c.h.b16 %v1804
      %v1834 = vunpack.c.l.b16 %v1805
      %v1835 = vunpack.c.h.b16 %v1805
      %v1836 = vpack.c.b16 %v1822, %v1820
      %v1837 = vpack.c.b16 %v1823, %v1821
      %v1838 = vpack.c.b16 %v1826, %v1824
      %v1839 = vpack.c.b16 %v1827, %v1825
      %v1840 = vpack.c.b16 %v1830, %v1828
      %v1841 = vpack.c.b16 %v1831, %v1829
      %v1842 = vpack.c.b16 %v1834, %v1832
      %v1843 = vpack.c.b16 %v1835, %v1833
      %v1853 = vsel %vm1236, %v1797, 0
      %1855 = vmatpush.bf16.msra.mxu0 0
      %1856 = vmatpush.bf16.msra.mxu0 0
      %1857 = vmatpush.bf16.msra.mxu0 0
      %1858 = vmatpush.bf16.msra.mxu0 0
      %1859 = vmatpush.bf16.msra.mxu0 %v1842
      %1860 = vmatpush.bf16.msra.mxu0 %v1840
      %1861 = vmatpush.bf16.msra.mxu0 %v1838
      %1862 = vmatpush.bf16.msra.mxu0 %v1836
      %1863 = vmatmul.bf16.gmra.mxu0 %v1853
      %v1864 = vpop.f32.mrf.mxu0
      %v1865 = vadd.f32 %v1808, %v1864
      %v1866 = vpop.f32.mrf.mxu0
      %1867 = vdwg.mxu0
      %1868 = vmatpush.bf16.msra.mxu0 0
      %1869 = vmatpush.bf16.msra.mxu0 0
      %1870 = vmatpush.bf16.msra.mxu0 0
      %1871 = vmatpush.bf16.msra.mxu0 0
      %1872 = vmatpush.bf16.msra.mxu0 %v1843
      %1873 = vmatpush.bf16.msra.mxu0 %v1841
      %1874 = vmatpush.bf16.msra.mxu0 %v1839
      %1875 = vmatpush.bf16.msra.mxu0 %v1837
      %1876 = vmatmul.bf16.gmra.mxu0 %v1853
      %v1877 = vpop.f32.mrf.mxu0
      %v1878 = vadd.f32 %v1809, %v1877
      %v1879 = vpop.f32.mrf.mxu0
      %1880 = vdwg.mxu0
      %v1881 = vxor.u32 %v1865, 2147483648
      %v1882 = vxor.u32 %v1878, 2147483648
      %v1883 = vmul.f32 %v1881, 1.442695
      %v1884 = vpow.pop %v1883
      %v1885 = vmul.f32 %v1882, 1.442695
      %v1886 = vpow.pop %v1885
      %v1887 = vadd.f32 %v1884, 1.0
      %v1888 = vadd.f32 %v1886, 1.0
      %v1889 = vrcp.pop %v1887
      %v1890 = vmul.f32 %v1887, %v1889
      %v1891 = vsub.f32 1.0, %v1890
      %v1892 = vmul.f32 %v1889, %v1891
      %v1893 = vadd.f32 %v1889, %v1892
      %vm1894 = vweird.f32 %v1887
      %vm1895 = vweird.f32 %v1889
      %vm1896 = vmor %vm1894, %vm1895
      %v1897 = vsel %vm1896, %v1889, %v1893
      %v1898 = vand.u32 2147483647, %v1887
      %vm1899 = vcmp.eq.f32.partialorder %v1898, 8.507059e+37
      %v1900 = vand.u32 %v1887, 2147483648
      %v1901 = vor.u32 1.1754944e-38, %v1900
      %v1902 = vsel %vm1899, %v1901, %v1897
      %v1903 = vmul.f32 1.0, %v1902
      %v1904 = vrcp.pop %v1888
      %v1905 = vmul.f32 %v1888, %v1904
      %v1906 = vsub.f32 1.0, %v1905
      %v1907 = vmul.f32 %v1904, %v1906
      %v1908 = vadd.f32 %v1904, %v1907
      %vm1909 = vweird.f32 %v1888
      %vm1910 = vweird.f32 %v1904
      %vm1911 = vmor %vm1909, %vm1910
      %v1912 = vsel %vm1911, %v1904, %v1908
      %v1913 = vand.u32 2147483647, %v1888
      %vm1914 = vcmp.eq.f32.partialorder %v1913, 8.507059e+37
      %v1915 = vand.u32 %v1888, 2147483648
      %v1916 = vor.u32 1.1754944e-38, %v1915
      %v1917 = vsel %vm1914, %v1916, %v1912
      %v1918 = vmul.f32 1.0, %v1917
      %1919 = vst [vmem:[%s1006] sm:$0xff] %v1903
      %1920 = vst [vmem:[%s1006 + $0x8] sm:$0xff] %v1918
      %p1921 = scmp.lt.s32.totalorder %s73, 1
      %s1922 = scalar_select %p1921, %s73, 1
      %s1923 = smul.addr %s1922, 8
      %s1924 = scalar_lea.vmem %s59, %s1923
      %p1925 = scmp.lt.s32.totalorder %s73, 1
      %s1926 = scalar_select %p1925, %s73, 1
      %s1927 = smul.addr %s1926, 2
      %s1928 = smul.addr %s1927, 8
      %s1929 = scalar_lea.vmem %s61, %s1928
      // Predicated region
      $region137: #{catcon_forward.1} parent=135 // pred_check
        %p1930 = pneg %p725
      $region138: #{catcon_forward.1} parent=135 // pred_check_branch
        %1932 = sbr.rel (%p1930) target = $region140
      $region139: #{catcon_forward.1} parent=135 // pred_region
        _
      $region140: #{catcon_forward.1} parent=135 // pred_fallthru
        _
      // Predicated region
      $region141: #{catcon_forward.1} parent=135 // pred_check
        %p1933 = pneg %p751
      $region142: #{catcon_forward.1} parent=135 // pred_check_branch
        %1935 = sbr.rel (%p1933) target = $region144
      $region143: #{catcon_forward.1} parent=135 // pred_region
        _
      $region144: #{catcon_forward.1} parent=135 // pred_fallthru
        _
    $region136: #{catcon_forward.1} parent=5 // pred_fallthru
      _
    %p1936 = scmp.le.s32.totalorder 2, %s68
    // Predicated region
    $region145: #{catcon_forward.1} parent=5 // pred_check
      %p1937 = pneg %p1936
    $region146: #{catcon_forward.1} parent=5 // pred_check_branch
      %1939 = sbr.rel (%p1937) target = $region148
    $region147: #{catcon_forward.1} parent=5 // pred_region
      %s1940 = ssub.s32 %s68, 2
      // Predicated region
      $region149: #{catcon_forward.1} parent=147 // pred_check
        %p1941 = pneg %p731
      $region150: #{catcon_forward.1} parent=147 // pred_check_branch
        %1943 = sbr.rel (%p1941) target = $region152
      $region151: #{catcon_forward.1} parent=147 // pred_region
        %p1944 = scmp.lt.s32.totalorder %s74, 1
        %s1945 = scalar_select %p1944, %s74, 1
        %s1946 = smul.addr %s1945, 8
        %s1947 = scalar_lea.vmem %s59, %s1946
      $region152: #{catcon_forward.1} parent=147 // pred_fallthru
        _
      // Predicated region
      $region153: #{catcon_forward.1} parent=147 // pred_check
        %p1948 = pneg %p757
      $region154: #{catcon_forward.1} parent=147 // pred_check_branch
        %1950 = sbr.rel (%p1948) target = $region156
      $region155: #{catcon_forward.1} parent=147 // pred_region
        %p1951 = scmp.lt.s32.totalorder %s74, 1
        %s1952 = scalar_select %p1951, %s74, 1
        %s1953 = smul.addr %s1952, 2
        %s1954 = smul.addr %s1953, 8
        %s1955 = scalar_lea.vmem %s61, %s1954
      $region156: #{catcon_forward.1} parent=147 // pred_fallthru
        _
    $region148: #{catcon_forward.1} parent=5 // pred_fallthru
      _
  $region6: #{catcon_forward.1} parent=0 // loop_footer
    %s72 = sadd.s32 1, %s68
  $region7: #{catcon_forward.1} parent=0 // loop_footer_branch
    %67 = sbr.rel target = $region3
  $region8: #{catcon_forward.1} parent=0 // loop_exit
    _

</llo_original>
